<compile_context>
chip_gen: v7x
topology: tpu7x:2x2x1
jax: 0.10.0
libtpu: 0.0.40
codegen_flags: <defaults>
</compile_context>

<pallas_src>
import jax
import jax.numpy as jnp
from jax.experimental import pallas as pl
from jax.experimental.pallas import tpu as pltpu

MAX_LENGTH = 10
LANE = 128      # vreg lane width
SUBLANE = 8     # f32 vreg sublane width
NEG = -1e30     # bias pad value so padded softmax logits underflow to exp()=0


def _round_up(x, m):
    return (x + m - 1) // m * m


# ----------------------------------------------------------------------------
# Kernel: whole decode in one invocation; weights VMEM-resident; steps unrolled.
# ----------------------------------------------------------------------------
def attn_decoder_kernel(
    tok_ref,       # (T*Bp, 1)  int32 token ids (t-major, b-minor)
    emb_tab_ref,   # (Vp, Hp)   embedding table
    hid0_ref,      # (Bp, Hp)   initial hidden state
    enc_ref,       # (L, Bp, Hp) encoder outputs (real L, padded B/H)
    w_emb_ref,     # (Hp, Lp+Hp) [attn emb-half | combine emb-half]
    w_attn_h_ref,  # (Hp, Lp)   attn hidden-half
    w_comb_a_ref,  # (Hp, Hp)   combine attn_applied-half
    w_gru_x_ref,   # (Hp, 4Hp)  GRU input weight, cols [r | z | i_n | 0]
    w_gru_h_ref,   # (Hp, 4Hp)  GRU hidden weight, cols [r | z | 0 | h_n]
    w_out_ref,     # (Hp, Vp)   output projection
    bias_ref,      # (1, Lp + 5Hp + Vp) packed [attn | comb | gru | out]
    out_ref,       # (T, Bp, Vp + Hp + Lp) packed [probs | new hidden | attn_w]
    part_ref,      # VMEM scratch (T*Bp, Lp+Hp): hoisted embedding partials
):
    T, Bp, _ = out_ref.shape
    L = enc_ref.shape[0]
    Hp = hid0_ref.shape[1]
    Lp = w_attn_h_ref.shape[1]
    Vp = w_out_ref.shape[1]
    TB = tok_ref.shape[0]

    b_gru = bias_ref[:, Lp + Hp:Lp + 5 * Hp]
    b_out = bias_ref[:, Lp + 5 * Hp:Lp + 5 * Hp + Vp]

    # ---- Prologue (runs once): in-kernel embedding gather as a one-hot MXU
    # matmul, then the hoisted emb-dependent halves of attn / attn_combine for
    # all T steps in a single well-shaped dot (M = T*Bp rows).
    toks = tok_ref[...]                                              # (TB, 1)
    iota = jax.lax.broadcasted_iota(jnp.int32, (TB, Vp), 1)
    onehot = jnp.where(iota == toks, 1.0, 0.0)                       # (TB, Vp)
    emb_flat = jnp.dot(onehot, emb_tab_ref[...],
                       preferred_element_type=jnp.float32)           # (TB, Hp)
    part_ref[...] = (jnp.dot(emb_flat, w_emb_ref[...],
                             preferred_element_type=jnp.float32)
                     + bias_ref[:, 0:Lp + Hp])                       # (TB, Lp+Hp)

    # ---- Recurrence, fully unrolled (T is static and small) ----
    hid = hid0_ref[...]                                              # (Bp, Hp)
    for t in range(T):
        p = part_ref[t * Bp:(t + 1) * Bp, :]                         # (Bp, Lp+Hp)

        # attn_weights = softmax(emb@W_a_emb + hid@W_a_hid + b_attn)
        attn_logits = p[:, 0:Lp] + jnp.dot(
            hid, w_attn_h_ref[...], preferred_element_type=jnp.float32)
        m1 = jnp.max(attn_logits, axis=1, keepdims=True)
        e1 = jnp.exp(attn_logits - m1)
        attn_w = e1 * pl.reciprocal(jnp.sum(e1, axis=1, keepdims=True),
                                    approx=True)

        # attn_applied = sum_l attn_w[:, l] * enc[l]  (VPU FMA over real L only)
        attn_applied = attn_w[:, 0:1] * enc_ref[0]
        for l in range(1, L):
            attn_applied = attn_applied + attn_w[:, l:l + 1] * enc_ref[l]

        # x = relu(emb@W_c_emb + attn_applied@W_c_app + b_comb)
        comb = p[:, Lp:Lp + Hp] + jnp.dot(
            attn_applied, w_comb_a_ref[...], preferred_element_type=jnp.float32)
        x = jnp.maximum(comb, 0.0)

        # single-step GRU, split half-depth dots (PyTorch gate order r, z, n)
        gates = (jnp.dot(x, w_gru_x_ref[...],
                         preferred_element_type=jnp.float32)
                 + jnp.dot(hid, w_gru_h_ref[...],
                           preferred_element_type=jnp.float32)
                 + b_gru)
        r = jax.nn.sigmoid(gates[:, 0:Hp])
        z = jax.nn.sigmoid(gates[:, Hp:2 * Hp])
        n = jnp.tanh(gates[:, 2 * Hp:3 * Hp] + r * gates[:, 3 * Hp:4 * Hp])
        hid = (1.0 - z) * n + z * hid

        # output = softmax(h_new @ W_out + b_out)   (exact division)
        logits = jnp.dot(hid, w_out_ref[...],
                         preferred_element_type=jnp.float32) + b_out
        m2 = jnp.max(logits, axis=1, keepdims=True)
        e2 = jnp.exp(logits - m2)
        probs = e2 / jnp.sum(e2, axis=1, keepdims=True)

        # Lane-dense packed output slab: [probs | h_new | attn_w].
        out_ref[t, :, 0:Vp] = probs
        out_ref[t, :, Vp:Vp + Hp] = hid
        out_ref[t, :, Vp + Hp:Vp + Hp + Lp] = attn_w


# ----------------------------------------------------------------------------
# Parameter construction / packing.
# ----------------------------------------------------------------------------
def init_params(key, hidden_size, output_size, max_length):
    """Logical parameters, equivalent to the PyTorch module (weights stored
    transposed, i.e. (in_features, out_features))."""
    ks = jax.random.split(key, 6)

    def linear(k, fan_in, fan_out):
        bound = 1.0 / (fan_in ** 0.5)
        kw, kb = jax.random.split(k)
        w = jax.random.uniform(kw, (fan_in, fan_out), jnp.float32, -bound, bound)
        b = jax.random.uniform(kb, (fan_out,), jnp.float32, -bound, bound)
        return w, b

    embedding = jax.random.normal(ks[0], (output_size, hidden_size), jnp.float32)
    w_attn, b_attn = linear(ks[1], 2 * hidden_size, max_length)
    w_comb, b_comb = linear(ks[2], 2 * hidden_size, hidden_size)
    w_ih, b_ih = linear(ks[3], hidden_size, 3 * hidden_size)
    w_hh, b_hh = linear(ks[4], hidden_size, 3 * hidden_size)
    w_out, b_out = linear(ks[5], hidden_size, output_size)
    return dict(embedding=embedding, w_attn=w_attn, b_attn=b_attn,
                w_comb=w_comb, b_comb=b_comb, w_ih=w_ih, b_ih=b_ih,
                w_hh=w_hh, b_hh=b_hh, w_out=w_out, b_out=b_out)


def pack_params(params, hidden_size, output_size, max_length):
    """Pad/pack logical parameters into lane-aligned, MXU-friendly operands.
    NOTE: padded weight rows/cols must stay exactly zero so the NEG-padded
    softmax biases stay exactly NEG in the padded logits (no NaN/overflow)."""
    H, V, L = hidden_size, output_size, max_length
    Hp = _round_up(H, LANE)
    Vp = _round_up(V, LANE)
    Lp = _round_up(L, LANE)

    emb_tab = jnp.zeros((Vp, Hp), jnp.float32).at[:V, :H].set(params["embedding"])

    w_attn, w_comb = params["w_attn"], params["w_comb"]
    # hoisted embedding halves of attn / attn_combine, fused into one matrix
    w_emb = (jnp.zeros((Hp, Lp + Hp), jnp.float32)
             .at[0:H, 0:L].set(w_attn[0:H])
             .at[0:H, Lp:Lp + H].set(w_comb[0:H]))
    w_attn_h = jnp.zeros((Hp, Lp), jnp.float32).at[0:H, 0:L].set(w_attn[H:2 * H])
    w_comb_a = jnp.zeros((Hp, Hp), jnp.float32).at[0:H, 0:H].set(w_comb[H:2 * H])

    # split GRU weights, col blocks [r | z | i_n | h_n]
    w_ih, w_hh = params["w_ih"], params["w_hh"]
    b_ih, b_hh = params["b_ih"], params["b_hh"]
    w_gru_x = (jnp.zeros((Hp, 4 * Hp), jnp.float32)
               .at[0:H, 0:H].set(w_ih[:, 0:H])                       # r (x)
               .at[0:H, Hp:Hp + H].set(w_ih[:, H:2 * H])             # z (x)
               .at[0:H, 2 * Hp:2 * Hp + H].set(w_ih[:, 2 * H:3 * H]))  # i_n
    w_gru_h = (jnp.zeros((Hp, 4 * Hp), jnp.float32)
               .at[0:H, 0:H].set(w_hh[:, 0:H])                       # r (h)
               .at[0:H, Hp:Hp + H].set(w_hh[:, H:2 * H])             # z (h)
               .at[0:H, 3 * Hp:3 * Hp + H].set(w_hh[:, 2 * H:3 * H]))  # h_n
    b_gru = (jnp.zeros((4 * Hp,), jnp.float32)
             .at[0:H].set(b_ih[0:H] + b_hh[0:H])
             .at[Hp:Hp + H].set(b_ih[H:2 * H] + b_hh[H:2 * H])
             .at[2 * Hp:2 * Hp + H].set(b_ih[2 * H:3 * H])
             .at[3 * Hp:3 * Hp + H].set(b_hh[2 * H:3 * H]))

    w_out = jnp.zeros((Hp, Vp), jnp.float32).at[0:H, 0:V].set(params["w_out"])

    b_attn = jnp.full((Lp,), NEG, jnp.float32).at[0:L].set(params["b_attn"])
    b_comb = jnp.zeros((Hp,), jnp.float32).at[0:H].set(params["b_comb"])
    b_out = jnp.full((Vp,), NEG, jnp.float32).at[0:V].set(params["b_out"])
    biases = jnp.concatenate([b_attn, b_comb, b_gru, b_out])[None, :]

    return dict(emb_tab=emb_tab, w_emb=w_emb, w_attn_h=w_attn_h,
                w_comb_a=w_comb_a, w_gru_x=w_gru_x, w_gru_h=w_gru_h,
                w_out=w_out, biases=biases, dims=(H, V, L, Hp, Vp, Lp))


# ----------------------------------------------------------------------------
# Wrappers.
# ----------------------------------------------------------------------------
def attn_decoder_decode(packed, tokens, hidden, encoder_outputs):
    """Run T teacher-forced decode steps inside ONE pallas_call invocation.
    tokens: (T, B) int32; hidden: (1, B, H); encoder_outputs: (L, B, H).
    Returns per-step (probs (T,B,V), hidden (T,B,H), attn_weights (T,B,L))."""
    H, V, L, Hp, Vp, Lp = packed["dims"]
    T, B = tokens.shape
    Bp = _round_up(B, SUBLANE)
    W = Vp + Hp + Lp
    TB = T * Bp
    nbias = packed["biases"].shape[1]

    # Tiny int/pad glue only; embedding gather now happens inside the kernel.
    tok_p = jnp.pad(tokens.astype(jnp.int32),
                    ((0, 0), (0, Bp - B))).reshape(TB, 1)
    hid0 = jnp.pad(hidden[0], ((0, Bp - B), (0, Hp - H)))            # (Bp, Hp)
    enc = jnp.pad(encoder_outputs,
                  ((0, 0), (0, Bp - B), (0, Hp - H)))                # (L, Bp, Hp)

    flops = 2 * (TB * Vp * Hp + TB * Hp * (Lp + Hp)
                 + T * Bp * (Hp * Lp + Hp * Hp + 2 * Hp * 4 * Hp
                             + Hp * Vp + L * Hp))
    transcendentals = T * Bp * (Lp + Vp + 3 * Hp)
    bytes_accessed = 4 * (Vp * Hp + Hp * (Lp + Hp) + Hp * Lp + Hp * Hp
                          + 2 * Hp * 4 * Hp + Hp * Vp + nbias
                          + Bp * Hp + L * Bp * Hp + TB + T * Bp * W)

    grid_spec = pltpu.PrefetchScalarGridSpec(
        num_scalar_prefetch=0,
        grid=(1,),
        in_specs=[
            pl.BlockSpec((TB, 1), lambda i: (0, 0)),           # tokens
            pl.BlockSpec((Vp, Hp), lambda i: (0, 0)),          # embedding table
            pl.BlockSpec((Bp, Hp), lambda i: (0, 0)),          # initial hidden
            pl.BlockSpec((L, Bp, Hp), lambda i: (0, 0, 0)),    # encoder outputs
            pl.BlockSpec((Hp, Lp + Hp), lambda i: (0, 0)),     # emb halves (hoisted)
            pl.BlockSpec((Hp, Lp), lambda i: (0, 0)),          # attn hidden half
            pl.BlockSpec((Hp, Hp), lambda i: (0, 0)),          # combine applied half
            pl.BlockSpec((Hp, 4 * Hp), lambda i: (0, 0)),      # GRU input weight
            pl.BlockSpec((Hp, 4 * Hp), lambda i: (0, 0)),      # GRU hidden weight
            pl.BlockSpec((Hp, Vp), lambda i: (0, 0)),          # output projection
            pl.BlockSpec((1, nbias), lambda i: (0, 0)),        # packed biases
        ],
        out_specs=pl.BlockSpec((T, Bp, W), lambda i: (0, 0, 0)),
        scratch_shapes=[pltpu.VMEM((TB, Lp + Hp), jnp.float32)],
    )

    slab = pl.pallas_call(
        attn_decoder_kernel,
        out_shape=jax.ShapeDtypeStruct((T, Bp, W), jnp.float32),
        grid_spec=grid_spec,
        compiler_params=pltpu.CompilerParams(
            dimension_semantics=("arbitrary",)),
        cost_estimate=pl.CostEstimate(flops=flops,
                                      transcendentals=transcendentals,
                                      bytes_accessed=bytes_accessed),
    )(tok_p, packed["emb_tab"], hid0, enc,
      packed["w_emb"], packed["w_attn_h"], packed["w_comb_a"],
      packed["w_gru_x"], packed["w_gru_h"], packed["w_out"], packed["biases"])

    out = slab[:, :B, 0:V]
    hid_seq = slab[:, :B, Vp:Vp + H]
    attn_seq = slab[:, :B, Vp + Hp:Vp + Hp + L]
    return out, hid_seq, attn_seq


def attn_decoder_forward(packed, input_ids, hidden, encoder_outputs):
    """Module-equivalent single step (AttnDecoderRNN.forward, eval mode).
    input_ids: (1, B); hidden: (1, B, H); encoder_outputs: (L, B, H)."""
    out, hid_seq, attn = attn_decoder_decode(packed, input_ids, hidden,
                                             encoder_outputs)
    return out[0], hid_seq[-1][None], attn[0]


# ----------------------------------------------------------------------------
# Pure-JAX reference mirroring the PyTorch forward (eval mode).
# ----------------------------------------------------------------------------
def reference_step(params, token_ids, hid, enc_blh):
    H = hid.shape[1]
    emb = jnp.take(params["embedding"], token_ids, axis=0)
    cat = jnp.concatenate([emb, hid], axis=1)
    attn_w = jax.nn.softmax(cat @ params["w_attn"] + params["b_attn"], axis=1)
    attn_applied = jnp.einsum("bl,blh->bh", attn_w, enc_blh)
    comb = (jnp.concatenate([emb, attn_applied], axis=1) @ params["w_comb"]
            + params["b_comb"])
    x = jax.nn.relu(comb)
    gi = x @ params["w_ih"] + params["b_ih"]
    gh = hid @ params["w_hh"] + params["b_hh"]
    r = jax.nn.sigmoid(gi[:, :H] + gh[:, :H])
    z = jax.nn.sigmoid(gi[:, H:2 * H] + gh[:, H:2 * H])
    n = jnp.tanh(gi[:, 2 * H:] + r * gh[:, 2 * H:])
    h_new = (1.0 - z) * n + z * hid
    out = jax.nn.softmax(h_new @ params["w_out"] + params["b_out"], axis=1)
    return out, h_new, attn_w


def reference_decode(params, tokens, hidden, encoder_outputs):
    enc_blh = jnp.transpose(encoder_outputs, (1, 0, 2))
    hid = hidden[0]
    outs, hids, attns = [], [], []
    for t in range(tokens.shape[0]):
        out, hid, attn_w = reference_step(params, tokens[t], hid, enc_blh)
        outs.append(out)
        hids.append(hid)
        attns.append(attn_w)
    return jnp.stack(outs), jnp.stack(hids), jnp.stack(attns)


if __name__ == "__main__":
    hidden_size = 128    # lane-aligned small size (wrapper pads any H/V/L)
    output_size = 20
    batch = 8            # sublane-aligned (wrapper pads other batch sizes)
    steps = 6

    key = jax.random.PRNGKey(0)
    k_par, k_tok, k_hid, k_enc = jax.random.split(key, 4)

    params = init_params(k_par, hidden_size, output_size, MAX_LENGTH)
    packed = pack_params(params, hidden_size, output_size, MAX_LENGTH)

    tokens = jax.random.randint(k_tok, (steps, batch), 0, output_size,
                                dtype=jnp.int32)
    hidden = jax.random.normal(k_hid, (1, batch, hidden_size), jnp.float32)
    encoder_outputs = jax.random.normal(
        k_enc, (MAX_LENGTH, batch, hidden_size), jnp.float32)

    # Only approximation source left is pl.reciprocal(approx=True) in the
    # attention softmax (output softmax uses exact division).
    TOL = dict(atol=1e-2, rtol=1e-2)

    # (a) module-equivalent single step: forward(input, hidden, encoder_outputs)
    out1, hid1, attn1 = jax.block_until_ready(
        attn_decoder_forward(packed, tokens[:1], hidden, encoder_outputs))
    r_out, r_hid, r_attn = reference_decode(params, tokens[:1], hidden,
                                            encoder_outputs)
    assert out1.shape == (batch, output_size)
    assert hid1.shape == (1, batch, hidden_size)
    assert attn1.shape == (batch, MAX_LENGTH)
    assert jnp.allclose(out1, r_out[0], **TOL)
    assert jnp.allclose(hid1[0], r_hid[0], **TOL)
    assert jnp.allclose(attn1, r_attn[0], **TOL)

    # (b) multi-step teacher-forced decode fused into one kernel invocation
    outs, hids, attns = jax.block_until_ready(
        attn_decoder_decode(packed, tokens, hidden, encoder_outputs))
    r_outs, r_hids, r_attns = reference_decode(params, tokens, hidden,
                                               encoder_outputs)
    assert outs.shape == (steps, batch, output_size)
    assert hids.shape == (steps, batch, hidden_size)
    assert attns.shape == (steps, batch, MAX_LENGTH)
    assert jnp.allclose(outs, r_outs, **TOL)
    assert jnp.allclose(hids, r_hids, **TOL)
    assert jnp.allclose(attns, r_attns, **TOL)

    print("KERNEL_OK")
</pallas_src>

<mosaic_0001>
module attributes {stable_mosaic.version = 11 : i64} {
  func.func @attn_decoder_kernel(%arg0: i32, %arg1: memref<8x1xi32, #tpu.memory_space<vmem>>, %arg2: memref<128x128xf32, #tpu.memory_space<vmem>>, %arg3: memref<8x128xf32, #tpu.memory_space<vmem>>, %arg4: memref<10x8x128xf32, #tpu.memory_space<vmem>>, %arg5: memref<128x256xf32, #tpu.memory_space<vmem>>, %arg6: memref<128x128xf32, #tpu.memory_space<vmem>>, %arg7: memref<128x128xf32, #tpu.memory_space<vmem>>, %arg8: memref<128x512xf32, #tpu.memory_space<vmem>>, %arg9: memref<128x512xf32, #tpu.memory_space<vmem>>, %arg10: memref<128x128xf32, #tpu.memory_space<vmem>>, %arg11: memref<1x896xf32, #tpu.memory_space<vmem>>, %arg12: memref<1x8x384xf32, #tpu.memory_space<vmem>>, %arg13: memref<8x256xf32, #tpu.memory_space<vmem>>) attributes {dimension_semantics = [#tpu.dimension_semantics<arbitrary>], iteration_bounds = array<i64: 1>, scalar_prefetch = 0 : i64, scratch_operands = 1 : i64, tpu.core_type = #tpu.core_type<tc>, window_params = [{pipeline_mode = #tpu.pipeline_mode<synchronous>, transform_indices = @transform_0, window_bounds = array<i64: 8, 1>}, {pipeline_mode = #tpu.pipeline_mode<synchronous>, transform_indices = @transform_1, window_bounds = array<i64: 128, 128>}, {pipeline_mode = #tpu.pipeline_mode<synchronous>, transform_indices = @transform_2, window_bounds = array<i64: 8, 128>}, {pipeline_mode = #tpu.pipeline_mode<synchronous>, transform_indices = @transform_3, window_bounds = array<i64: 10, 8, 128>}, {pipeline_mode = #tpu.pipeline_mode<synchronous>, transform_indices = @transform_4, window_bounds = array<i64: 128, 256>}, {pipeline_mode = #tpu.pipeline_mode<synchronous>, transform_indices = @transform_5, window_bounds = array<i64: 128, 128>}, {pipeline_mode = #tpu.pipeline_mode<synchronous>, transform_indices = @transform_6, window_bounds = array<i64: 128, 128>}, {pipeline_mode = #tpu.pipeline_mode<synchronous>, transform_indices = @transform_7, window_bounds = array<i64: 128, 512>}, {pipeline_mode = #tpu.pipeline_mode<synchronous>, transform_indices = @transform_8, window_bounds = array<i64: 128, 512>}, {pipeline_mode = #tpu.pipeline_mode<synchronous>, transform_indices = @transform_9, window_bounds = array<i64: 128, 128>}, {pipeline_mode = #tpu.pipeline_mode<synchronous>, transform_indices = @transform_10, window_bounds = array<i64: 1, 896>}, {pipeline_mode = #tpu.pipeline_mode<synchronous>, transform_indices = @transform_11, window_bounds = array<i64: 1, 8, 384>}]} {
    %c0 = arith.constant 0 : index
    %c256 = arith.constant 256 : index
    %0 = vector.load %arg11[%c0, %c256] : memref<1x896xf32, #tpu.memory_space<vmem>>, vector<1x512xf32>
    %c0_0 = arith.constant 0 : index
    %c768 = arith.constant 768 : index
    %1 = vector.load %arg11[%c0_0, %c768] : memref<1x896xf32, #tpu.memory_space<vmem>>, vector<1x128xf32>
    %c0_1 = arith.constant 0 : index
    %c0_2 = arith.constant 0 : index
    %2 = vector.load %arg1[%c0_1, %c0_2] : memref<8x1xi32, #tpu.memory_space<vmem>>, vector<8x1xi32>
    %3 = tpu.iota {dimensions = array<i32: 1>} : vector<8x128xi32>
    %4 = vector.broadcast %2 : vector<8x1xi32> to vector<8x128xi32>
    %5 = arith.cmpi eq, %3, %4 : vector<8x128xi32>
    %cst = arith.constant 1.000000e+00 : f32
    %cst_3 = arith.constant 0.000000e+00 : f32
    %6 = vector.broadcast %cst : f32 to vector<8x128xf32>
    %7 = vector.broadcast %cst_3 : f32 to vector<8x128xf32>
    %8 = arith.select %5, %6, %7 : vector<8x128xi1>, vector<8x128xf32>
    %c0_4 = arith.constant 0 : index
    %c0_5 = arith.constant 0 : index
    %9 = vector.load %arg2[%c0_4, %c0_5] : memref<128x128xf32, #tpu.memory_space<vmem>>, vector<128x128xf32>
    %cst_6 = arith.constant dense<0.000000e+00> : vector<8x128xf32>
    %10 = tpu.matmul %8, %9, %cst_6 {dimension_numbers = #tpu.dot_dimension_numbers<[1], [0], [0], [1], [0, 0, 1, 1], [], []>} : vector<8x128xf32>, vector<128x128xf32>, vector<8x128xf32> -> vector<8x128xf32>
    %c0_7 = arith.constant 0 : index
    %c0_8 = arith.constant 0 : index
    %11 = vector.load %arg5[%c0_7, %c0_8] : memref<128x256xf32, #tpu.memory_space<vmem>>, vector<128x256xf32>
    %cst_9 = arith.constant dense<0.000000e+00> : vector<8x256xf32>
    %12 = tpu.matmul %10, %11, %cst_9 {dimension_numbers = #tpu.dot_dimension_numbers<[1], [0], [0], [1], [0, 0, 1, 1], [], []>} : vector<8x128xf32>, vector<128x256xf32>, vector<8x256xf32> -> vector<8x256xf32>
    %c0_10 = arith.constant 0 : index
    %c0_11 = arith.constant 0 : index
    %13 = vector.load %arg11[%c0_10, %c0_11] : memref<1x896xf32, #tpu.memory_space<vmem>>, vector<1x256xf32>
    %14 = vector.broadcast %13 : vector<1x256xf32> to vector<8x256xf32>
    %15 = arith.addf %12, %14 : vector<8x256xf32>
    %c0_12 = arith.constant 0 : index
    %c0_13 = arith.constant 0 : index
    %16 = vector.load %arg13[%c0_12, %c0_13] : memref<8x256xf32, #tpu.memory_space<vmem>>, vector<8x256xf32>
    tpu.vector_store %arg13[%c0_12, %c0_13], %15 {strides = array<i32>} : memref<8x256xf32, #tpu.memory_space<vmem>>, vector<8x256xf32>,
    %c0_14 = arith.constant 0 : index
    %c0_15 = arith.constant 0 : index
    %17 = vector.load %arg3[%c0_14, %c0_15] : memref<8x128xf32, #tpu.memory_space<vmem>>, vector<8x128xf32>
    %c0_16 = arith.constant 0 : index
    %c0_17 = arith.constant 0 : index
    %18 = vector.load %arg13[%c0_16, %c0_17] : memref<8x256xf32, #tpu.memory_space<vmem>>, vector<8x256xf32>
    %19 = vector.extract_strided_slice %18 {offsets = [0, 0], sizes = [8, 128], strides = [1, 1]} : vector<8x256xf32> to vector<8x128xf32>
    %c0_18 = arith.constant 0 : index
    %c0_19 = arith.constant 0 : index
    %20 = vector.load %arg6[%c0_18, %c0_19] : memref<128x128xf32, #tpu.memory_space<vmem>>, vector<128x128xf32>
    %cst_20 = arith.constant dense<0.000000e+00> : vector<8x128xf32>
    %21 = tpu.matmul %17, %20, %cst_20 {dimension_numbers = #tpu.dot_dimension_numbers<[1], [0], [0], [1], [0, 0, 1, 1], [], []>} : vector<8x128xf32>, vector<128x128xf32>, vector<8x128xf32> -> vector<8x128xf32>
    %22 = arith.addf %19, %21 : vector<8x128xf32>
    %cst_21 = arith.constant dense<0xFF800000> : vector<8xf32>
    %23 = vector.multi_reduction <maximumf>, %22, %cst_21 [1] : vector<8x128xf32> to vector<8xf32>
    %24 = vector.shape_cast %23 : vector<8xf32> to vector<8x1xf32>
    %25 = vector.broadcast %24 : vector<8x1xf32> to vector<8x128xf32>
    %26 = arith.subf %22, %25 : vector<8x128xf32>
    %27 = math.exp %26 : vector<8x128xf32>
    %cst_22 = arith.constant dense<0.000000e+00> : vector<8xf32>
    %28 = vector.multi_reduction <add>, %27, %cst_22 [1] : vector<8x128xf32> to vector<8xf32>
    %29 = vector.shape_cast %28 : vector<8xf32> to vector<8x1xf32>
    %30 = tpu.reciprocal %29 {approx = true} : vector<8x1xf32> -> vector<8x1xf32>
    %31 = vector.broadcast %30 : vector<8x1xf32> to vector<8x128xf32>
    %32 = arith.mulf %27, %31 : vector<8x128xf32>
    %33 = vector.extract_strided_slice %32 {offsets = [0, 0], sizes = [8, 1], strides = [1, 1]} : vector<8x128xf32> to vector<8x1xf32>
    %c0_23 = arith.constant 0 : index
    %c0_24 = arith.constant 0 : index
    %c0_25 = arith.constant 0 : index
    %34 = vector.load %arg4[%c0_23, %c0_24, %c0_25] : memref<10x8x128xf32, #tpu.memory_space<vmem>>, vector<1x8x128xf32>
    %35 = vector.shape_cast %34 : vector<1x8x128xf32> to vector<8x128xf32>
    %36 = vector.broadcast %33 : vector<8x1xf32> to vector<8x128xf32>
    %37 = arith.mulf %36, %35 : vector<8x128xf32>
    %38 = vector.extract_strided_slice %32 {offsets = [0, 1], sizes = [8, 1], strides = [1, 1]} : vector<8x128xf32> to vector<8x1xf32>
    %c1 = arith.constant 1 : index
    %c0_26 = arith.constant 0 : index
    %c0_27 = arith.constant 0 : index
    %39 = vector.load %arg4[%c1, %c0_26, %c0_27] : memref<10x8x128xf32, #tpu.memory_space<vmem>>, vector<1x8x128xf32>
    %40 = vector.shape_cast %39 : vector<1x8x128xf32> to vector<8x128xf32>
    %41 = vector.broadcast %38 : vector<8x1xf32> to vector<8x128xf32>
    %42 = arith.mulf %41, %40 : vector<8x128xf32>
    %43 = arith.addf %37, %42 : vector<8x128xf32>
    %44 = vector.extract_strided_slice %32 {offsets = [0, 2], sizes = [8, 1], strides = [1, 1]} : vector<8x128xf32> to vector<8x1xf32>
    %c2 = arith.constant 2 : index
    %c0_28 = arith.constant 0 : index
    %c0_29 = arith.constant 0 : index
    %45 = vector.load %arg4[%c2, %c0_28, %c0_29] : memref<10x8x128xf32, #tpu.memory_space<vmem>>, vector<1x8x128xf32>
    %46 = vector.shape_cast %45 : vector<1x8x128xf32> to vector<8x128xf32>
    %47 = vector.broadcast %44 : vector<8x1xf32> to vector<8x128xf32>
    %48 = arith.mulf %47, %46 : vector<8x128xf32>
    %49 = arith.addf %43, %48 : vector<8x128xf32>
    %50 = vector.extract_strided_slice %32 {offsets = [0, 3], sizes = [8, 1], strides = [1, 1]} : vector<8x128xf32> to vector<8x1xf32>
    %c3 = arith.constant 3 : index
    %c0_30 = arith.constant 0 : index
    %c0_31 = arith.constant 0 : index
    %51 = vector.load %arg4[%c3, %c0_30, %c0_31] : memref<10x8x128xf32, #tpu.memory_space<vmem>>, vector<1x8x128xf32>
    %52 = vector.shape_cast %51 : vector<1x8x128xf32> to vector<8x128xf32>
    %53 = vector.broadcast %50 : vector<8x1xf32> to vector<8x128xf32>
    %54 = arith.mulf %53, %52 : vector<8x128xf32>
    %55 = arith.addf %49, %54 : vector<8x128xf32>
    %56 = vector.extract_strided_slice %32 {offsets = [0, 4], sizes = [8, 1], strides = [1, 1]} : vector<8x128xf32> to vector<8x1xf32>
    %c4 = arith.constant 4 : index
    %c0_32 = arith.constant 0 : index
    %c0_33 = arith.constant 0 : index
    %57 = vector.load %arg4[%c4, %c0_32, %c0_33] : memref<10x8x128xf32, #tpu.memory_space<vmem>>, vector<1x8x128xf32>
    %58 = vector.shape_cast %57 : vector<1x8x128xf32> to vector<8x128xf32>
    %59 = vector.broadcast %56 : vector<8x1xf32> to vector<8x128xf32>
    %60 = arith.mulf %59, %58 : vector<8x128xf32>
    %61 = arith.addf %55, %60 : vector<8x128xf32>
    %62 = vector.extract_strided_slice %32 {offsets = [0, 5], sizes = [8, 1], strides = [1, 1]} : vector<8x128xf32> to vector<8x1xf32>
    %c5 = arith.constant 5 : index
    %c0_34 = arith.constant 0 : index
    %c0_35 = arith.constant 0 : index
    %63 = vector.load %arg4[%c5, %c0_34, %c0_35] : memref<10x8x128xf32, #tpu.memory_space<vmem>>, vector<1x8x128xf32>
    %64 = vector.shape_cast %63 : vector<1x8x128xf32> to vector<8x128xf32>
    %65 = vector.broadcast %62 : vector<8x1xf32> to vector<8x128xf32>
    %66 = arith.mulf %65, %64 : vector<8x128xf32>
    %67 = arith.addf %61, %66 : vector<8x128xf32>
    %68 = vector.extract_strided_slice %32 {offsets = [0, 6], sizes = [8, 1], strides = [1, 1]} : vector<8x128xf32> to vector<8x1xf32>
    %c6 = arith.constant 6 : index
    %c0_36 = arith.constant 0 : index
    %c0_37 = arith.constant 0 : index
    %69 = vector.load %arg4[%c6, %c0_36, %c0_37] : memref<10x8x128xf32, #tpu.memory_space<vmem>>, vector<1x8x128xf32>
    %70 = vector.shape_cast %69 : vector<1x8x128xf32> to vector<8x128xf32>
    %71 = vector.broadcast %68 : vector<8x1xf32> to vector<8x128xf32>
    %72 = arith.mulf %71, %70 : vector<8x128xf32>
    %73 = arith.addf %67, %72 : vector<8x128xf32>
    %74 = vector.extract_strided_slice %32 {offsets = [0, 7], sizes = [8, 1], strides = [1, 1]} : vector<8x128xf32> to vector<8x1xf32>
    %c7 = arith.constant 7 : index
    %c0_38 = arith.constant 0 : index
    %c0_39 = arith.constant 0 : index
    %75 = vector.load %arg4[%c7, %c0_38, %c0_39] : memref<10x8x128xf32, #tpu.memory_space<vmem>>, vector<1x8x128xf32>
    %76 = vector.shape_cast %75 : vector<1x8x128xf32> to vector<8x128xf32>
    %77 = vector.broadcast %74 : vector<8x1xf32> to vector<8x128xf32>
    %78 = arith.mulf %77, %76 : vector<8x128xf32>
    %79 = arith.addf %73, %78 : vector<8x128xf32>
    %80 = vector.extract_strided_slice %32 {offsets = [0, 8], sizes = [8, 1], strides = [1, 1]} : vector<8x128xf32> to vector<8x1xf32>
    %c8 = arith.constant 8 : index
    %c0_40 = arith.constant 0 : index
    %c0_41 = arith.constant 0 : index
    %81 = vector.load %arg4[%c8, %c0_40, %c0_41] : memref<10x8x128xf32, #tpu.memory_space<vmem>>, vector<1x8x128xf32>
    %82 = vector.shape_cast %81 : vector<1x8x128xf32> to vector<8x128xf32>
    %83 = vector.broadcast %80 : vector<8x1xf32> to vector<8x128xf32>
    %84 = arith.mulf %83, %82 : vector<8x128xf32>
    %85 = arith.addf %79, %84 : vector<8x128xf32>
    %86 = vector.extract_strided_slice %32 {offsets = [0, 9], sizes = [8, 1], strides = [1, 1]} : vector<8x128xf32> to vector<8x1xf32>
    %c9 = arith.constant 9 : index
    %c0_42 = arith.constant 0 : index
    %c0_43 = arith.constant 0 : index
    %87 = vector.load %arg4[%c9, %c0_42, %c0_43] : memref<10x8x128xf32, #tpu.memory_space<vmem>>, vector<1x8x128xf32>
    %88 = vector.shape_cast %87 : vector<1x8x128xf32> to vector<8x128xf32>
    %89 = vector.broadcast %86 : vector<8x1xf32> to vector<8x128xf32>
    %90 = arith.mulf %89, %88 : vector<8x128xf32>
    %91 = arith.addf %85, %90 : vector<8x128xf32>
    %92 = vector.extract_strided_slice %18 {offsets = [0, 128], sizes = [8, 128], strides = [1, 1]} : vector<8x256xf32> to vector<8x128xf32>
    %c0_44 = arith.constant 0 : index
    %c0_45 = arith.constant 0 : index
    %93 = vector.load %arg7[%c0_44, %c0_45] : memref<128x128xf32, #tpu.memory_space<vmem>>, vector<128x128xf32>
    %cst_46 = arith.constant dense<0.000000e+00> : vector<8x128xf32>
    %94 = tpu.matmul %91, %93, %cst_46 {dimension_numbers = #tpu.dot_dimension_numbers<[1], [0], [0], [1], [0, 0, 1, 1], [], []>} : vector<8x128xf32>, vector<128x128xf32>, vector<8x128xf32> -> vector<8x128xf32>
    %95 = arith.addf %92, %94 : vector<8x128xf32>
    %cst_47 = arith.constant 0.000000e+00 : f32
    %96 = vector.broadcast %cst_47 : f32 to vector<8x128xf32>
    %97 = arith.maximumf %95, %96 : vector<8x128xf32>
    %c0_48 = arith.constant 0 : index
    %c0_49 = arith.constant 0 : index
    %98 = vector.load %arg8[%c0_48, %c0_49] : memref<128x512xf32, #tpu.memory_space<vmem>>, vector<128x512xf32>
    %cst_50 = arith.constant dense<0.000000e+00> : vector<8x512xf32>
    %99 = tpu.matmul %97, %98, %cst_50 {dimension_numbers = #tpu.dot_dimension_numbers<[1], [0], [0], [1], [0, 0, 1, 1], [], []>} : vector<8x128xf32>, vector<128x512xf32>, vector<8x512xf32> -> vector<8x512xf32>
    %c0_51 = arith.constant 0 : index
    %c0_52 = arith.constant 0 : index
    %100 = vector.load %arg9[%c0_51, %c0_52] : memref<128x512xf32, #tpu.memory_space<vmem>>, vector<128x512xf32>
    %cst_53 = arith.constant dense<0.000000e+00> : vector<8x512xf32>
    %101 = tpu.matmul %17, %100, %cst_53 {dimension_numbers = #tpu.dot_dimension_numbers<[1], [0], [0], [1], [0, 0, 1, 1], [], []>} : vector<8x128xf32>, vector<128x512xf32>, vector<8x512xf32> -> vector<8x512xf32>
    %102 = arith.addf %99, %101 : vector<8x512xf32>
    %103 = vector.broadcast %0 : vector<1x512xf32> to vector<8x512xf32>
    %104 = arith.addf %102, %103 : vector<8x512xf32>
    %105 = vector.extract_strided_slice %104 {offsets = [0, 0], sizes = [8, 128], strides = [1, 1]} : vector<8x512xf32> to vector<8x128xf32>
    %106 = arith.negf %105 : vector<8x128xf32>
    %107 = math.exp %106 : vector<8x128xf32>
    %cst_54 = arith.constant 1.000000e+00 : f32
    %108 = vector.broadcast %cst_54 : f32 to vector<8x128xf32>
    %109 = arith.addf %108, %107 : vector<8x128xf32>
    %110 = arith.divf %108, %109 : vector<8x128xf32>
    %111 = vector.extract_strided_slice %104 {offsets = [0, 128], sizes = [8, 128], strides = [1, 1]} : vector<8x512xf32> to vector<8x128xf32>
    %112 = arith.negf %111 : vector<8x128xf32>
    %113 = math.exp %112 : vector<8x128xf32>
    %cst_55 = arith.constant 1.000000e+00 : f32
    %114 = vector.broadcast %cst_55 : f32 to vector<8x128xf32>
    %115 = arith.addf %114, %113 : vector<8x128xf32>
    %116 = arith.divf %114, %115 : vector<8x128xf32>
    %117 = vector.extract_strided_slice %104 {offsets = [0, 256], sizes = [8, 128], strides = [1, 1]} : vector<8x512xf32> to vector<8x128xf32>
    %118 = vector.extract_strided_slice %104 {offsets = [0, 384], sizes = [8, 128], strides = [1, 1]} : vector<8x512xf32> to vector<8x128xf32>
    %119 = arith.mulf %110, %118 : vector<8x128xf32>
    %120 = arith.addf %117, %119 : vector<8x128xf32>
    %121 = math.tanh %120 : vector<8x128xf32>
    %cst_56 = arith.constant 1.000000e+00 : f32
    %122 = vector.broadcast %cst_56 : f32 to vector<8x128xf32>
    %123 = arith.subf %122, %116 : vector<8x128xf32>
    %124 = arith.mulf %123, %121 : vector<8x128xf32>
    %125 = arith.mulf %116, %17 : vector<8x128xf32>
    %126 = arith.addf %124, %125 : vector<8x128xf32>
    %c0_57 = arith.constant 0 : index
    %c0_58 = arith.constant 0 : index
    %127 = vector.load %arg10[%c0_57, %c0_58] : memref<128x128xf32, #tpu.memory_space<vmem>>, vector<128x128xf32>
    %cst_59 = arith.constant dense<0.000000e+00> : vector<8x128xf32>
    %128 = tpu.matmul %126, %127, %cst_59 {dimension_numbers = #tpu.dot_dimension_numbers<[1], [0], [0], [1], [0, 0, 1, 1], [], []>} : vector<8x128xf32>, vector<128x128xf32>, vector<8x128xf32> -> vector<8x128xf32>
    %129 = vector.broadcast %1 : vector<1x128xf32> to vector<8x128xf32>
    %130 = arith.addf %128, %129 : vector<8x128xf32>
    %cst_60 = arith.constant dense<0xFF800000> : vector<8xf32>
    %131 = vector.multi_reduction <maximumf>, %130, %cst_60 [1] : vector<8x128xf32> to vector<8xf32>
    %132 = vector.shape_cast %131 : vector<8xf32> to vector<8x1xf32>
    %133 = vector.broadcast %132 : vector<8x1xf32> to vector<8x128xf32>
    %134 = arith.subf %130, %133 : vector<8x128xf32>
    %135 = math.exp %134 : vector<8x128xf32>
    %cst_61 = arith.constant dense<0.000000e+00> : vector<8xf32>
    %136 = vector.multi_reduction <add>, %135, %cst_61 [1] : vector<8x128xf32> to vector<8xf32>
    %137 = vector.shape_cast %136 : vector<8xf32> to vector<8x1xf32>
    %138 = vector.broadcast %137 : vector<8x1xf32> to vector<8x128xf32>
    %139 = arith.divf %135, %138 : vector<8x128xf32>
    %c0_62 = arith.constant 0 : index
    %c0_63 = arith.constant 0 : index
    %c0_64 = arith.constant 0 : index
    %140 = vector.load %arg12[%c0_62, %c0_63, %c0_64] : memref<1x8x384xf32, #tpu.memory_space<vmem>>, vector<1x8x128xf32>
    %141 = vector.shape_cast %140 : vector<1x8x128xf32> to vector<8x128xf32>
    %142 = vector.shape_cast %139 : vector<8x128xf32> to vector<1x8x128xf32>
    tpu.vector_store %arg12[%c0_62, %c0_63, %c0_64], %142 {strides = array<i32>} : memref<1x8x384xf32, #tpu.memory_space<vmem>>, vector<1x8x128xf32>,
    %c0_65 = arith.constant 0 : index
    %c0_66 = arith.constant 0 : index
    %c128 = arith.constant 128 : index
    %143 = vector.load %arg12[%c0_65, %c0_66, %c128] : memref<1x8x384xf32, #tpu.memory_space<vmem>>, vector<1x8x128xf32>
    %144 = vector.shape_cast %143 : vector<1x8x128xf32> to vector<8x128xf32>
    %145 = vector.shape_cast %126 : vector<8x128xf32> to vector<1x8x128xf32>
    tpu.vector_store %arg12[%c0_65, %c0_66, %c128], %145 {strides = array<i32>} : memref<1x8x384xf32, #tpu.memory_space<vmem>>, vector<1x8x128xf32>,
    %c0_67 = arith.constant 0 : index
    %c0_68 = arith.constant 0 : index
    %c256_69 = arith.constant 256 : index
    %146 = vector.load %arg12[%c0_67, %c0_68, %c256_69] : memref<1x8x384xf32, #tpu.memory_space<vmem>>, vector<1x8x128xf32>
    %147 = vector.shape_cast %146 : vector<1x8x128xf32> to vector<8x128xf32>
    %148 = vector.shape_cast %32 : vector<8x128xf32> to vector<1x8x128xf32>
    tpu.vector_store %arg12[%c0_67, %c0_68, %c256_69], %148 {strides = array<i32>} : memref<1x8x384xf32, #tpu.memory_space<vmem>>, vector<1x8x128xf32>,
    return
  }
  func.func @transform_0(%arg0: i32) -> (i32, i32) {
    %c0_i32 = arith.constant 0 : i32
    %c0_i32_0 = arith.constant 0 : i32
    %c0_i32_1 = arith.constant 0 : i32
    return %c0_i32, %c0_i32_0 : i32, i32
  }
  func.func @transform_1(%arg0: i32) -> (i32, i32) {
    %c0_i32 = arith.constant 0 : i32
    %c0_i32_0 = arith.constant 0 : i32
    %c0_i32_1 = arith.constant 0 : i32
    return %c0_i32, %c0_i32_0 : i32, i32
  }
  func.func @transform_2(%arg0: i32) -> (i32, i32) {
    %c0_i32 = arith.constant 0 : i32
    %c0_i32_0 = arith.constant 0 : i32
    %c0_i32_1 = arith.constant 0 : i32
    return %c0_i32, %c0_i32_0 : i32, i32
  }
  func.func @transform_3(%arg0: i32) -> (i32, i32, i32) {
    %c0_i32 = arith.constant 0 : i32
    %c0_i32_0 = arith.constant 0 : i32
    %c0_i32_1 = arith.constant 0 : i32
    %c0_i32_2 = arith.constant 0 : i32
    return %c0_i32, %c0_i32_0, %c0_i32_1 : i32, i32, i32
  }
  func.func @transform_4(%arg0: i32) -> (i32, i32) {
    %c0_i32 = arith.constant 0 : i32
    %c0_i32_0 = arith.constant 0 : i32
    %c0_i32_1 = arith.constant 0 : i32
    return %c0_i32, %c0_i32_0 : i32, i32
  }
  func.func @transform_5(%arg0: i32) -> (i32, i32) {
    %c0_i32 = arith.constant 0 : i32
    %c0_i32_0 = arith.constant 0 : i32
    %c0_i32_1 = arith.constant 0 : i32
    return %c0_i32, %c0_i32_0 : i32, i32
  }
  func.func @transform_6(%arg0: i32) -> (i32, i32) {
    %c0_i32 = arith.constant 0 : i32
    %c0_i32_0 = arith.constant 0 : i32
    %c0_i32_1 = arith.constant 0 : i32
    return %c0_i32, %c0_i32_0 : i32, i32
  }
  func.func @transform_7(%arg0: i32) -> (i32, i32) {
    %c0_i32 = arith.constant 0 : i32
    %c0_i32_0 = arith.constant 0 : i32
    %c0_i32_1 = arith.constant 0 : i32
    return %c0_i32, %c0_i32_0 : i32, i32
  }
  func.func @transform_8(%arg0: i32) -> (i32, i32) {
    %c0_i32 = arith.constant 0 : i32
    %c0_i32_0 = arith.constant 0 : i32
    %c0_i32_1 = arith.constant 0 : i32
    return %c0_i32, %c0_i32_0 : i32, i32
  }
  func.func @transform_9(%arg0: i32) -> (i32, i32) {
    %c0_i32 = arith.constant 0 : i32
    %c0_i32_0 = arith.constant 0 : i32
    %c0_i32_1 = arith.constant 0 : i32
    return %c0_i32, %c0_i32_0 : i32, i32
  }
  func.func @transform_10(%arg0: i32) -> (i32, i32) {
    %c0_i32 = arith.constant 0 : i32
    %c0_i32_0 = arith.constant 0 : i32
    %c0_i32_1 = arith.constant 0 : i32
    return %c0_i32, %c0_i32_0 : i32, i32
  }
  func.func @transform_11(%arg0: i32) -> (i32, i32, i32) {
    %c0_i32 = arith.constant 0 : i32
    %c0_i32_0 = arith.constant 0 : i32
    %c0_i32_1 = arith.constant 0 : i32
    %c0_i32_2 = arith.constant 0 : i32
    return %c0_i32, %c0_i32_0, %c0_i32_1 : i32, i32, i32
  }
}

</mosaic_0001>

<llo_original>
// kernel: tpu_custom_call.1
$region0: #{tpu_custom_call.1}
  #allocation0 [shape = 'u32[]', space=smem, size = 0x4, offset = 0x4, fixed_abs, tag = 'smem constant byte address 0x4 - core index']
  #allocation1 [shape = 'u32[144,128]{1,0:T(1,128)}', space=vmem, size = 0x12000, scoped, tag = 'internal scratch']
  #allocation2 [shape = 'f32[8,256]{1,0:T(8,128)}', space=vmem, size = 0x2000, scoped, tag = 'scratch operand']
  %s0 = inlined_call_operand.vmem [shape: s32[8,1], index: 0, kind: input, shape index: {}]
  %s1 = inlined_call_operand.hbm [shape: f32[128,128], index: 1, kind: input, shape index: {}]
  %s2 = inlined_call_operand.vmem [shape: f32[8,128], index: 2, kind: input, shape index: {}]
  %s3 = inlined_call_operand.hbm [shape: f32[10,8,128], index: 3, kind: input, shape index: {}]
  %s4 = inlined_call_operand.hbm [shape: f32[128,256], index: 4, kind: input, shape index: {}]
  %s5 = inlined_call_operand.hbm [shape: f32[128,128], index: 5, kind: input, shape index: {}]
  %s6 = inlined_call_operand.hbm [shape: f32[128,128], index: 6, kind: input, shape index: {}]
  %s7 = inlined_call_operand.hbm [shape: f32[128,512], index: 7, kind: input, shape index: {}]
  %s8 = inlined_call_operand.hbm [shape: f32[128,512], index: 8, kind: input, shape index: {}]
  %s9 = inlined_call_operand.hbm [shape: f32[128,128], index: 9, kind: input, shape index: {}]
  %s10 = inlined_call_operand.vmem [shape: f32[1,896], index: 10, kind: input, shape index: {}]
  %s11 = inlined_call_operand.hbm [shape: f32[1,8,384], index: 11, kind: output, shape index: {}]
  %s12 = sld [smem:[#allocation0]]
  $region86: #{tpu_custom_call.1} parent=0
    _
  %s14 = ssub.s32 1, %s12
  %s15 = scalar_select 0, %s14, %s12
  $region1: #{tpu_custom_call.1} parent=0
    #allocation3 [shape = 'u8[65536]{0}', space=vmem, size = 0x10000, scoped, tag = 'input window, operand 1, single buffered']
    #allocation4 [shape = 's32[1]{0}', space=sflag, size = 0x4, scoped, tag = 'scoped memory for tpu_custom_call.1']
    #allocation5 [shape = 's32[1]{0}', space=sflag, size = 0x4, scoped, tag = 'scoped memory for tpu_custom_call.1']
    #allocation6 [shape = 'u8[40960]{0}', space=vmem, size = 0xa000, scoped, tag = 'input window, operand 3, single buffered']
    #allocation7 [shape = 's32[1]{0}', space=sflag, size = 0x4, scoped, tag = 'scoped memory for tpu_custom_call.1']
    #allocation8 [shape = 'u8[131072]{0}', space=vmem, size = 0x20000, scoped, tag = 'input window, operand 4, single buffered']
    #allocation9 [shape = 'u8[65536]{0}', space=vmem, size = 0x10000, scoped, tag = 'input window, operand 5, single buffered']
    #allocation10 [shape = 's32[1]{0}', space=sflag, size = 0x4, scoped, tag = 'scoped memory for tpu_custom_call.1']
    #allocation11 [shape = 'u8[65536]{0}', space=vmem, size = 0x10000, scoped, tag = 'input window, operand 6, single buffered']
    #allocation12 [shape = 'u8[262144]{0}', space=vmem, size = 0x40000, scoped, tag = 'input window, operand 7, single buffered']
    #allocation13 [shape = 's32[1]{0}', space=sflag, size = 0x4, scoped, tag = 'scoped memory for tpu_custom_call.1']
    #allocation14 [shape = 'u8[262144]{0}', space=vmem, size = 0x40000, scoped, tag = 'input window, operand 8, single buffered']
    #allocation15 [shape = 'u8[65536]{0}', space=vmem, size = 0x10000, scoped, tag = 'input window, operand 9, single buffered']
    #allocation16 [shape = 's32[1]{0}', space=sflag, size = 0x4, scoped, tag = 'scoped memory for tpu_custom_call.1']
    #allocation17 [shape = 'u8[12288]{0}', space=vmem, size = 0x3000, scoped, tag = 'output window, operand 0, single buffered']
    %16 = vsyncpa [#allocation4], 0
    %17 = vsyncpa [#allocation7], 0
    %18 = vsyncpa [#allocation10], 0
    %19 = vsyncpa [#allocation13], 0
    %20 = vsyncpa [#allocation16], 0
    %21 = vsyncpa [#allocation5], 0
    // Predicated region
    $region2: #{tpu_custom_call.1} parent=1 // pred_check
      _
    $region3: #{tpu_custom_call.1} parent=1 // pred_check_branch
      %23 = sbr.rel (0) target = $region5
    $region4: #{tpu_custom_call.1} parent=1 // pred_region
      _
    $region5: #{tpu_custom_call.1} parent=1 // pred_fallthru
      _
    // Predicated region
    $region6: #{tpu_custom_call.1} parent=1 // pred_check
      _
    $region7: #{tpu_custom_call.1} parent=1 // pred_check_branch
      %25 = sbr.rel (0) target = $region9
    $region8: #{tpu_custom_call.1} parent=1 // pred_region
      %s27 = ssub.s32 2048, 2048
      %28 = vsyncadd [#allocation4], %s27
      %s29 = sshll.u32 [#allocation3], 4
      %s30 = int_to_ptr.vmem [resolvable:$true] %s29
      %35 = dma.hbm_to_vmem [thread:$0]  %s1, 2048, %s30, [#allocation4], 128, 128, 8
    $region9: #{tpu_custom_call.1} parent=1 // pred_fallthru
      _
    // Predicated region
    $region10: #{tpu_custom_call.1} parent=1 // pred_check
      _
    $region11: #{tpu_custom_call.1} parent=1 // pred_check_branch
      %37 = sbr.rel (0) target = $region13
    $region12: #{tpu_custom_call.1} parent=1 // pred_region
      _
    $region13: #{tpu_custom_call.1} parent=1 // pred_fallthru
      _
    // Predicated region
    $region14: #{tpu_custom_call.1} parent=1 // pred_check
      _
    $region15: #{tpu_custom_call.1} parent=1 // pred_check_branch
      %39 = sbr.rel (0) target = $region17
    $region16: #{tpu_custom_call.1} parent=1 // pred_region
      %s41 = ssub.s32 1280, 1280
      %42 = vsyncadd [#allocation7], %s41
      %s43 = sshll.u32 [#allocation6], 4
      %s44 = int_to_ptr.vmem [resolvable:$true] %s43
      %49 = dma.hbm_to_vmem [thread:$0]  %s3, 1280, %s44, [#allocation7], 128, 128, 8
    $region17: #{tpu_custom_call.1} parent=1 // pred_fallthru
      _
    // Predicated region
    $region18: #{tpu_custom_call.1} parent=1 // pred_check
      _
    $region19: #{tpu_custom_call.1} parent=1 // pred_check_branch
      %51 = sbr.rel (0) target = $region21
    $region20: #{tpu_custom_call.1} parent=1 // pred_region
      %s53 = ssub.s32 4096, 4096
      %54 = vsyncadd [#allocation7], %s53
      %s55 = sshll.u32 [#allocation8], 4
      %s56 = int_to_ptr.vmem [resolvable:$true] %s55
      %61 = dma.hbm_to_vmem [thread:$0]  %s4, 4096, %s56, [#allocation7], 256, 256, 16
    $region21: #{tpu_custom_call.1} parent=1 // pred_fallthru
      _
    // Predicated region
    $region22: #{tpu_custom_call.1} parent=1 // pred_check
      _
    $region23: #{tpu_custom_call.1} parent=1 // pred_check_branch
      %63 = sbr.rel (0) target = $region25
    $region24: #{tpu_custom_call.1} parent=1 // pred_region
      %s65 = ssub.s32 2048, 2048
      %66 = vsyncadd [#allocation10], %s65
      %s67 = sshll.u32 [#allocation9], 4
      %s68 = int_to_ptr.vmem [resolvable:$true] %s67
      %73 = dma.hbm_to_vmem [thread:$0]  %s5, 2048, %s68, [#allocation10], 128, 128, 8
    $region25: #{tpu_custom_call.1} parent=1 // pred_fallthru
      _
    // Predicated region
    $region26: #{tpu_custom_call.1} parent=1 // pred_check
      _
    $region27: #{tpu_custom_call.1} parent=1 // pred_check_branch
      %75 = sbr.rel (0) target = $region29
    $region28: #{tpu_custom_call.1} parent=1 // pred_region
      %s77 = ssub.s32 2048, 2048
      %78 = vsyncadd [#allocation10], %s77
      %s79 = sshll.u32 [#allocation11], 4
      %s80 = int_to_ptr.vmem [resolvable:$true] %s79
      %85 = dma.hbm_to_vmem [thread:$0]  %s6, 2048, %s80, [#allocation10], 128, 128, 8
    $region29: #{tpu_custom_call.1} parent=1 // pred_fallthru
      _
    // Predicated region
    $region30: #{tpu_custom_call.1} parent=1 // pred_check
      _
    $region31: #{tpu_custom_call.1} parent=1 // pred_check_branch
      %87 = sbr.rel (0) target = $region33
    $region32: #{tpu_custom_call.1} parent=1 // pred_region
      %s89 = ssub.s32 8192, 8192
      %90 = vsyncadd [#allocation13], %s89
      %s91 = sshll.u32 [#allocation12], 4
      %s92 = int_to_ptr.vmem [resolvable:$true] %s91
      %97 = dma.hbm_to_vmem [thread:$0]  %s7, 8192, %s92, [#allocation13], 512, 512, 32
    $region33: #{tpu_custom_call.1} parent=1 // pred_fallthru
      _
    // Predicated region
    $region34: #{tpu_custom_call.1} parent=1 // pred_check
      _
    $region35: #{tpu_custom_call.1} parent=1 // pred_check_branch
      %99 = sbr.rel (0) target = $region37
    $region36: #{tpu_custom_call.1} parent=1 // pred_region
      %s101 = ssub.s32 8192, 8192
      %102 = vsyncadd [#allocation13], %s101
      %s103 = sshll.u32 [#allocation14], 4
      %s104 = int_to_ptr.vmem [resolvable:$true] %s103
      %109 = dma.hbm_to_vmem [thread:$0]  %s8, 8192, %s104, [#allocation13], 512, 512, 32
    $region37: #{tpu_custom_call.1} parent=1 // pred_fallthru
      _
    // Predicated region
    $region38: #{tpu_custom_call.1} parent=1 // pred_check
      _
    $region39: #{tpu_custom_call.1} parent=1 // pred_check_branch
      %111 = sbr.rel (0) target = $region41
    $region40: #{tpu_custom_call.1} parent=1 // pred_region
      %s113 = ssub.s32 2048, 2048
      %114 = vsyncadd [#allocation16], %s113
      %s115 = sshll.u32 [#allocation15], 4
      %s116 = int_to_ptr.vmem [resolvable:$true] %s115
      %121 = dma.hbm_to_vmem [thread:$0]  %s9, 2048, %s116, [#allocation16], 128, 128, 8
    $region41: #{tpu_custom_call.1} parent=1 // pred_fallthru
      _
    // Predicated region
    $region42: #{tpu_custom_call.1} parent=1 // pred_check
      _
    $region43: #{tpu_custom_call.1} parent=1 // pred_check_branch
      %123 = sbr.rel (0) target = $region45
    $region44: #{tpu_custom_call.1} parent=1 // pred_region
      _
    $region45: #{tpu_custom_call.1} parent=1 // pred_fallthru
      _
    // Predicated region
    $region46: #{tpu_custom_call.1} parent=1 // pred_check
      _
    $region47: #{tpu_custom_call.1} parent=1 // pred_check_branch
      %125 = sbr.rel (0) target = $region49
    $region48: #{tpu_custom_call.1} parent=1 // pred_region
      %126 = dma.done [#allocation4], 2048
    $region49: #{tpu_custom_call.1} parent=1 // pred_fallthru
      _
    // Predicated region
    $region50: #{tpu_custom_call.1} parent=1 // pred_check
      _
    $region51: #{tpu_custom_call.1} parent=1 // pred_check_branch
      %128 = sbr.rel (0) target = $region53
    $region52: #{tpu_custom_call.1} parent=1 // pred_region
      %129 = dma.done [#allocation7], 1280
    $region53: #{tpu_custom_call.1} parent=1 // pred_fallthru
      _
    // Predicated region
    $region54: #{tpu_custom_call.1} parent=1 // pred_check
      _
    $region55: #{tpu_custom_call.1} parent=1 // pred_check_branch
      %131 = sbr.rel (0) target = $region57
    $region56: #{tpu_custom_call.1} parent=1 // pred_region
      %132 = dma.done [#allocation7], 4096
    $region57: #{tpu_custom_call.1} parent=1 // pred_fallthru
      _
    // Predicated region
    $region58: #{tpu_custom_call.1} parent=1 // pred_check
      _
    $region59: #{tpu_custom_call.1} parent=1 // pred_check_branch
      %134 = sbr.rel (0) target = $region61
    $region60: #{tpu_custom_call.1} parent=1 // pred_region
      %135 = dma.done [#allocation10], 2048
    $region61: #{tpu_custom_call.1} parent=1 // pred_fallthru
      _
    // Predicated region
    $region62: #{tpu_custom_call.1} parent=1 // pred_check
      _
    $region63: #{tpu_custom_call.1} parent=1 // pred_check_branch
      %137 = sbr.rel (0) target = $region65
    $region64: #{tpu_custom_call.1} parent=1 // pred_region
      %138 = dma.done [#allocation10], 2048
    $region65: #{tpu_custom_call.1} parent=1 // pred_fallthru
      _
    // Predicated region
    $region66: #{tpu_custom_call.1} parent=1 // pred_check
      _
    $region67: #{tpu_custom_call.1} parent=1 // pred_check_branch
      %140 = sbr.rel (0) target = $region69
    $region68: #{tpu_custom_call.1} parent=1 // pred_region
      %141 = dma.done [#allocation13], 8192
    $region69: #{tpu_custom_call.1} parent=1 // pred_fallthru
      _
    // Predicated region
    $region70: #{tpu_custom_call.1} parent=1 // pred_check
      _
    $region71: #{tpu_custom_call.1} parent=1 // pred_check_branch
      %143 = sbr.rel (0) target = $region73
    $region72: #{tpu_custom_call.1} parent=1 // pred_region
      %144 = dma.done [#allocation13], 8192
    $region73: #{tpu_custom_call.1} parent=1 // pred_fallthru
      _
    // Predicated region
    $region74: #{tpu_custom_call.1} parent=1 // pred_check
      _
    $region75: #{tpu_custom_call.1} parent=1 // pred_check_branch
      %146 = sbr.rel (0) target = $region77
    $region76: #{tpu_custom_call.1} parent=1 // pred_region
      %147 = dma.done [#allocation16], 2048
    $region77: #{tpu_custom_call.1} parent=1 // pred_fallthru
      _
    %v148 = vld [vmem:[%s10 + $0x2] sm:$0xf]
    %v149 = vld [vmem:[%s10 + $0x6] sm:$0x1]
    %v150 = vld [vmem:[%s0] sm:$0xff]
    %v151 = vlaneseq
    %v152 = vand.u32 %v151, 127
    %153 = vset.pattern.permute.xlu0 0
    %154 = vperm.xlu0 %153, %v150
    %v155 = vpop.permute.xlu0 %154
    %vm156 = vcmp.eq.s32.totalorder %v152, %v155
    %v157 = vsel %vm156, 1.0, 0.0
    %v158 = vld [vmem:[#allocation3] sm:$0xff]
    %v159 = vld [vmem:[#allocation3 + $0x8] sm:$0xff]
    %v160 = vld [vmem:[#allocation3 + $0x10] sm:$0xff]
    %v161 = vld [vmem:[#allocation3 + $0x18] sm:$0xff]
    %v162 = vld [vmem:[#allocation3 + $0x20] sm:$0xff]
    %v163 = vld [vmem:[#allocation3 + $0x28] sm:$0xff]
    %v164 = vld [vmem:[#allocation3 + $0x30] sm:$0xff]
    %v165 = vld [vmem:[#allocation3 + $0x38] sm:$0xff]
    %v166 = vld [vmem:[#allocation3 + $0x40] sm:$0xff]
    %v167 = vld [vmem:[#allocation3 + $0x48] sm:$0xff]
    %v168 = vld [vmem:[#allocation3 + $0x50] sm:$0xff]
    %v169 = vld [vmem:[#allocation3 + $0x58] sm:$0xff]
    %v170 = vld [vmem:[#allocation3 + $0x60] sm:$0xff]
    %v171 = vld [vmem:[#allocation3 + $0x68] sm:$0xff]
    %v172 = vld [vmem:[#allocation3 + $0x70] sm:$0xff]
    %v173 = vld [vmem:[#allocation3 + $0x78] sm:$0xff]
    %174 = vmatprep.subr.mxu0 0.0
    %175 = vmatpush1.msra.mxu0 %v158
    %176 = vmatprep.subr.mxu0 0.0
    %177 = vmatpush1.msra.mxu0 %v159
    %178 = vmatprep.subr.mxu0 0.0
    %179 = vmatpush1.msra.mxu0 %v160
    %180 = vmatprep.subr.mxu0 0.0
    %181 = vmatpush1.msra.mxu0 %v161
    %182 = vmatprep.subr.mxu0 0.0
    %183 = vmatpush1.msra.mxu0 %v162
    %184 = vmatprep.subr.mxu0 0.0
    %185 = vmatpush1.msra.mxu0 %v163
    %186 = vmatprep.subr.mxu0 0.0
    %187 = vmatpush1.msra.mxu0 %v164
    %188 = vmatprep.subr.mxu0 0.0
    %189 = vmatpush1.msra.mxu0 %v165
    %190 = vmatprep.subr.mxu0 0.0
    %191 = vmatpush1.msra.mxu0 %v166
    %192 = vmatprep.subr.mxu0 0.0
    %193 = vmatpush1.msra.mxu0 %v167
    %194 = vmatprep.subr.mxu0 0.0
    %195 = vmatpush1.msra.mxu0 %v168
    %196 = vmatprep.subr.mxu0 0.0
    %197 = vmatpush1.msra.mxu0 %v169
    %198 = vmatprep.subr.mxu0 0.0
    %199 = vmatpush1.msra.mxu0 %v170
    %200 = vmatprep.subr.mxu0 0.0
    %201 = vmatpush1.msra.mxu0 %v171
    %202 = vmatprep.subr.mxu0 0.0
    %203 = vmatpush1.msra.mxu0 %v172
    %204 = vmatprep.subr.mxu0 0.0
    %205 = vmatpush1.msra.mxu0 %v173
    %206 = vmatprep.subr.mxu0 0.0
    %207 = vmatpush1.msra.mxu0 0.0
    %208 = vmatprep.subr.mxu0 0.0
    %209 = vmatpush1.msra.mxu0 0.0
    %210 = vmatprep.subr.mxu0 0.0
    %211 = vmatpush1.msra.mxu0 0.0
    %212 = vmatprep.subr.mxu0 0.0
    %213 = vmatpush1.msra.mxu0 0.0
    %214 = vmatprep.subr.mxu0 0.0
    %215 = vmatpush1.msra.mxu0 0.0
    %216 = vmatprep.subr.mxu0 0.0
    %217 = vmatpush1.msra.mxu0 0.0
    %218 = vmatprep.subr.mxu0 0.0
    %219 = vmatpush1.msra.mxu0 0.0
    %220 = vmatprep.subr.mxu0 0.0
    %221 = vmatpush1.msra.mxu0 0.0
    %222 = vmatprep.subr.mxu0 0.0
    %223 = vmatpush1.msra.mxu0 0.0
    %224 = vmatprep.subr.mxu0 0.0
    %225 = vmatpush1.msra.mxu0 0.0
    %226 = vmatprep.subr.mxu0 0.0
    %227 = vmatpush1.msra.mxu0 0.0
    %228 = vmatprep.subr.mxu0 0.0
    %229 = vmatpush1.msra.mxu0 0.0
    %230 = vmatprep.subr.mxu0 0.0
    %231 = vmatpush1.msra.mxu0 0.0
    %232 = vmatprep.subr.mxu0 0.0
    %233 = vmatpush1.msra.mxu0 0.0
    %234 = vmatprep.subr.mxu0 0.0
    %235 = vmatpush1.msra.mxu0 0.0
    %236 = vmatprep.subr.mxu0 0.0
    %237 = vmatpush1.msra.mxu0 0.0
    %238 = vmatprep.mubr.f32.mxu0 0.0
    %239 = vmatmul.mubr.f32.gmra.mrb[0].mxu0 %v157
    %v240 = vpop.f32.mrb[0].mxu0
    %v241 = vadd.f32 0.0, %v240
    %v242 = vpop.f32.mrb[0].mxu0
    %243 = vdwg.mxu0
    %v244 = vld [vmem:[#allocation8] sm:$0xff]
    %v245 = vld [vmem:[#allocation8 + $0x8] sm:$0xff]
    %v246 = vld [vmem:[#allocation8 + $0x10] sm:$0xff]
    %v247 = vld [vmem:[#allocation8 + $0x18] sm:$0xff]
    %v248 = vld [vmem:[#allocation8 + $0x20] sm:$0xff]
    %v249 = vld [vmem:[#allocation8 + $0x28] sm:$0xff]
    %v250 = vld [vmem:[#allocation8 + $0x30] sm:$0xff]
    %v251 = vld [vmem:[#allocation8 + $0x38] sm:$0xff]
    %v252 = vld [vmem:[#allocation8 + $0x40] sm:$0xff]
    %v253 = vld [vmem:[#allocation8 + $0x48] sm:$0xff]
    %v254 = vld [vmem:[#allocation8 + $0x50] sm:$0xff]
    %v255 = vld [vmem:[#allocation8 + $0x58] sm:$0xff]
    %v256 = vld [vmem:[#allocation8 + $0x60] sm:$0xff]
    %v257 = vld [vmem:[#allocation8 + $0x68] sm:$0xff]
    %v258 = vld [vmem:[#allocation8 + $0x70] sm:$0xff]
    %v259 = vld [vmem:[#allocation8 + $0x78] sm:$0xff]
    %v260 = vld [vmem:[#allocation8 + $0x80] sm:$0xff]
    %v261 = vld [vmem:[#allocation8 + $0x88] sm:$0xff]
    %v262 = vld [vmem:[#allocation8 + $0x90] sm:$0xff]
    %v263 = vld [vmem:[#allocation8 + $0x98] sm:$0xff]
    %v264 = vld [vmem:[#allocation8 + $0xa0] sm:$0xff]
    %v265 = vld [vmem:[#allocation8 + $0xa8] sm:$0xff]
    %v266 = vld [vmem:[#allocation8 + $0xb0] sm:$0xff]
    %v267 = vld [vmem:[#allocation8 + $0xb8] sm:$0xff]
    %v268 = vld [vmem:[#allocation8 + $0xc0] sm:$0xff]
    %v269 = vld [vmem:[#allocation8 + $0xc8] sm:$0xff]
    %v270 = vld [vmem:[#allocation8 + $0xd0] sm:$0xff]
    %v271 = vld [vmem:[#allocation8 + $0xd8] sm:$0xff]
    %v272 = vld [vmem:[#allocation8 + $0xe0] sm:$0xff]
    %v273 = vld [vmem:[#allocation8 + $0xe8] sm:$0xff]
    %v274 = vld [vmem:[#allocation8 + $0xf0] sm:$0xff]
    %v275 = vld [vmem:[#allocation8 + $0xf8] sm:$0xff]
    %v276 = vld [vmem:[%s10] sm:$0x3]
    %v278 = vlaneseq
    %v279 = vshrl.u32 %v278, 7
    %v280 = vsub.s32 0, %v279
    %v281 = vrot.slane %v276, %v280
    %v282 = vlaneseq
    %v283 = vshrl.u32 %v282, 7
    %v284 = vsub.s32 1, %v283
    %v285 = vrot.slane %v276, %v284
    %288 = vmatprep.subr.mxu0 %v245
    %289 = vmatpush1.msra.mxu0 %v244
    %290 = vmatprep.subr.mxu0 %v247
    %291 = vmatpush1.msra.mxu0 %v246
    %292 = vmatprep.subr.mxu0 %v249
    %293 = vmatpush1.msra.mxu0 %v248
    %294 = vmatprep.subr.mxu0 %v251
    %295 = vmatpush1.msra.mxu0 %v250
    %296 = vmatprep.subr.mxu0 %v253
    %297 = vmatpush1.msra.mxu0 %v252
    %298 = vmatprep.subr.mxu0 %v255
    %299 = vmatpush1.msra.mxu0 %v254
    %300 = vmatprep.subr.mxu0 %v257
    %301 = vmatpush1.msra.mxu0 %v256
    %302 = vmatprep.subr.mxu0 %v259
    %303 = vmatpush1.msra.mxu0 %v258
    %304 = vmatprep.subr.mxu0 %v261
    %305 = vmatpush1.msra.mxu0 %v260
    %306 = vmatprep.subr.mxu0 %v263
    %307 = vmatpush1.msra.mxu0 %v262
    %308 = vmatprep.subr.mxu0 %v265
    %309 = vmatpush1.msra.mxu0 %v264
    %310 = vmatprep.subr.mxu0 %v267
    %311 = vmatpush1.msra.mxu0 %v266
    %312 = vmatprep.subr.mxu0 %v269
    %313 = vmatpush1.msra.mxu0 %v268
    %314 = vmatprep.subr.mxu0 %v271
    %315 = vmatpush1.msra.mxu0 %v270
    %316 = vmatprep.subr.mxu0 %v273
    %317 = vmatpush1.msra.mxu0 %v272
    %318 = vmatprep.subr.mxu0 %v275
    %319 = vmatpush1.msra.mxu0 %v274
    %320 = vmatprep.subr.mxu0 0.0
    %321 = vmatpush1.msra.mxu0 0.0
    %322 = vmatprep.subr.mxu0 0.0
    %323 = vmatpush1.msra.mxu0 0.0
    %324 = vmatprep.subr.mxu0 0.0
    %325 = vmatpush1.msra.mxu0 0.0
    %326 = vmatprep.subr.mxu0 0.0
    %327 = vmatpush1.msra.mxu0 0.0
    %328 = vmatprep.subr.mxu0 0.0
    %329 = vmatpush1.msra.mxu0 0.0
    %330 = vmatprep.subr.mxu0 0.0
    %331 = vmatpush1.msra.mxu0 0.0
    %332 = vmatprep.subr.mxu0 0.0
    %333 = vmatpush1.msra.mxu0 0.0
    %334 = vmatprep.subr.mxu0 0.0
    %335 = vmatpush1.msra.mxu0 0.0
    %336 = vmatprep.subr.mxu0 0.0
    %337 = vmatpush1.msra.mxu0 0.0
    %338 = vmatprep.subr.mxu0 0.0
    %339 = vmatpush1.msra.mxu0 0.0
    %340 = vmatprep.subr.mxu0 0.0
    %341 = vmatpush1.msra.mxu0 0.0
    %342 = vmatprep.subr.mxu0 0.0
    %343 = vmatpush1.msra.mxu0 0.0
    %344 = vmatprep.subr.mxu0 0.0
    %345 = vmatpush1.msra.mxu0 0.0
    %346 = vmatprep.subr.mxu0 0.0
    %347 = vmatpush1.msra.mxu0 0.0
    %348 = vmatprep.subr.mxu0 0.0
    %349 = vmatpush1.msra.mxu0 0.0
    %350 = vmatprep.subr.mxu0 0.0
    %351 = vmatpush1.msra.mxu0 0.0
    %352 = vmatprep.mubr.f32.mxu0 0.0
    %353 = vmatmul.mubr.f32.gmra.mrb[0].mxu0 %v241
    %v354 = vpop.f32.mrb[0].mxu0
    %v355 = vadd.f32 %v281, %v354
    %v356 = vpop.f32.mrb[0].mxu0
    %v357 = vadd.f32 %v285, %v356
    %358 = vdwg.mxu0
    %359 = vst [vmem:[#allocation2] sm:$0xff] %v355
    %360 = vst [vmem:[#allocation2 + $0x8] sm:$0xff] %v357
    %v361 = vld [vmem:[%s2] sm:$0xff]
    %v362 = vld [vmem:[#allocation2] sm:$0xff]
    %v363 = vld [vmem:[#allocation2 + $0x8] sm:$0xff]
    %v364 = vld [vmem:[#allocation9] sm:$0xff]
    %v365 = vld [vmem:[#allocation9 + $0x8] sm:$0xff]
    %v366 = vld [vmem:[#allocation9 + $0x10] sm:$0xff]
    %v367 = vld [vmem:[#allocation9 + $0x18] sm:$0xff]
    %v368 = vld [vmem:[#allocation9 + $0x20] sm:$0xff]
    %v369 = vld [vmem:[#allocation9 + $0x28] sm:$0xff]
    %v370 = vld [vmem:[#allocation9 + $0x30] sm:$0xff]
    %v371 = vld [vmem:[#allocation9 + $0x38] sm:$0xff]
    %v372 = vld [vmem:[#allocation9 + $0x40] sm:$0xff]
    %v373 = vld [vmem:[#allocation9 + $0x48] sm:$0xff]
    %v374 = vld [vmem:[#allocation9 + $0x50] sm:$0xff]
    %v375 = vld [vmem:[#allocation9 + $0x58] sm:$0xff]
    %v376 = vld [vmem:[#allocation9 + $0x60] sm:$0xff]
    %v377 = vld [vmem:[#allocation9 + $0x68] sm:$0xff]
    %v378 = vld [vmem:[#allocation9 + $0x70] sm:$0xff]
    %v379 = vld [vmem:[#allocation9 + $0x78] sm:$0xff]
    %380 = vmatprep.subr.mxu0 0.0
    %381 = vmatpush1.msra.mxu0 %v364
    %382 = vmatprep.subr.mxu0 0.0
    %383 = vmatpush1.msra.mxu0 %v365
    %384 = vmatprep.subr.mxu0 0.0
    %385 = vmatpush1.msra.mxu0 %v366
    %386 = vmatprep.subr.mxu0 0.0
    %387 = vmatpush1.msra.mxu0 %v367
    %388 = vmatprep.subr.mxu0 0.0
    %389 = vmatpush1.msra.mxu0 %v368
    %390 = vmatprep.subr.mxu0 0.0
    %391 = vmatpush1.msra.mxu0 %v369
    %392 = vmatprep.subr.mxu0 0.0
    %393 = vmatpush1.msra.mxu0 %v370
    %394 = vmatprep.subr.mxu0 0.0
    %395 = vmatpush1.msra.mxu0 %v371
    %396 = vmatprep.subr.mxu0 0.0
    %397 = vmatpush1.msra.mxu0 %v372
    %398 = vmatprep.subr.mxu0 0.0
    %399 = vmatpush1.msra.mxu0 %v373
    %400 = vmatprep.subr.mxu0 0.0
    %401 = vmatpush1.msra.mxu0 %v374
    %402 = vmatprep.subr.mxu0 0.0
    %403 = vmatpush1.msra.mxu0 %v375
    %404 = vmatprep.subr.mxu0 0.0
    %405 = vmatpush1.msra.mxu0 %v376
    %406 = vmatprep.subr.mxu0 0.0
    %407 = vmatpush1.msra.mxu0 %v377
    %408 = vmatprep.subr.mxu0 0.0
    %409 = vmatpush1.msra.mxu0 %v378
    %410 = vmatprep.subr.mxu0 0.0
    %411 = vmatpush1.msra.mxu0 %v379
    %412 = vmatprep.subr.mxu0 0.0
    %413 = vmatpush1.msra.mxu0 0.0
    %414 = vmatprep.subr.mxu0 0.0
    %415 = vmatpush1.msra.mxu0 0.0
    %416 = vmatprep.subr.mxu0 0.0
    %417 = vmatpush1.msra.mxu0 0.0
    %418 = vmatprep.subr.mxu0 0.0
    %419 = vmatpush1.msra.mxu0 0.0
    %420 = vmatprep.subr.mxu0 0.0
    %421 = vmatpush1.msra.mxu0 0.0
    %422 = vmatprep.subr.mxu0 0.0
    %423 = vmatpush1.msra.mxu0 0.0
    %424 = vmatprep.subr.mxu0 0.0
    %425 = vmatpush1.msra.mxu0 0.0
    %426 = vmatprep.subr.mxu0 0.0
    %427 = vmatpush1.msra.mxu0 0.0
    %428 = vmatprep.subr.mxu0 0.0
    %429 = vmatpush1.msra.mxu0 0.0
    %430 = vmatprep.subr.mxu0 0.0
    %431 = vmatpush1.msra.mxu0 0.0
    %432 = vmatprep.subr.mxu0 0.0
    %433 = vmatpush1.msra.mxu0 0.0
    %434 = vmatprep.subr.mxu0 0.0
    %435 = vmatpush1.msra.mxu0 0.0
    %436 = vmatprep.subr.mxu0 0.0
    %437 = vmatpush1.msra.mxu0 0.0
    %438 = vmatprep.subr.mxu0 0.0
    %439 = vmatpush1.msra.mxu0 0.0
    %440 = vmatprep.subr.mxu0 0.0
    %441 = vmatpush1.msra.mxu0 0.0
    %442 = vmatprep.subr.mxu0 0.0
    %443 = vmatpush1.msra.mxu0 0.0
    %444 = vmatprep.mubr.f32.mxu0 0.0
    %445 = vmatmul.mubr.f32.gmra.mrb[0].mxu0 %v361
    %v446 = vpop.f32.mrb[0].mxu0
    %v447 = vadd.f32 0.0, %v446
    %v448 = vpop.f32.mrb[0].mxu0
    %449 = vdwg.mxu0
    %v450 = vadd.f32 %v362, %v447
    %451 = vmax.xlane.f32.xlu0 %v450
    %v452 = vpop.xlane.xlu0 %451
    %v453 = vsub.f32 %v450, %v452
    %v454 = vmul.f32 %v453, 1.442695
    %v455 = vpow.pop %v454
    %456 = vadd.xlane.f32.xlu0 %v455
    %v457 = vpop.xlane.xlu0 %456
    %v458 = vrcp.pop %v457
    %v459 = vmul.f32 %v455, %v458
    %v460 = vld [vmem:[#allocation6] sm:$0xff]
    %462 = vset.pattern.permute.xlu0 0
    %463 = vperm.xlu0 %462, %v459
    %v464 = vpop.permute.xlu0 %463
    %v466 = vmul.f32 %v464, %v460
    %s467 = scalar_lea.vmem [#allocation6], 8
    %v468 = vld [vmem:[%s467] sm:$0xff]
    %469 = vset.pattern.permute.xlu0 1
    %470 = vperm.xlu0 %469, %v459
    %v471 = vpop.permute.xlu0 %470
    %v473 = vmul.f32 %v471, %v468
    %v474 = vadd.f32 %v466, %v473
    %s475 = scalar_lea.vmem [#allocation6], 16
    %v476 = vld [vmem:[%s475] sm:$0xff]
    %477 = vset.pattern.permute.xlu0 2
    %478 = vperm.xlu0 %477, %v459
    %v479 = vpop.permute.xlu0 %478
    %v481 = vmul.f32 %v479, %v476
    %v482 = vadd.f32 %v474, %v481
    %s483 = scalar_lea.vmem [#allocation6], 24
    %v484 = vld [vmem:[%s483] sm:$0xff]
    %485 = vset.pattern.permute.xlu0 3
    %486 = vperm.xlu0 %485, %v459
    %v487 = vpop.permute.xlu0 %486
    %v489 = vmul.f32 %v487, %v484
    %v490 = vadd.f32 %v482, %v489
    %s491 = scalar_lea.vmem [#allocation6], 32
    %v492 = vld [vmem:[%s491] sm:$0xff]
    %493 = vset.pattern.permute.xlu0 4
    %494 = vperm.xlu0 %493, %v459
    %v495 = vpop.permute.xlu0 %494
    %v497 = vmul.f32 %v495, %v492
    %v498 = vadd.f32 %v490, %v497
    %s499 = scalar_lea.vmem [#allocation6], 40
    %v500 = vld [vmem:[%s499] sm:$0xff]
    %501 = vset.pattern.permute.xlu0 5
    %502 = vperm.xlu0 %501, %v459
    %v503 = vpop.permute.xlu0 %502
    %v505 = vmul.f32 %v503, %v500
    %v506 = vadd.f32 %v498, %v505
    %s507 = scalar_lea.vmem [#allocation6], 48
    %v508 = vld [vmem:[%s507] sm:$0xff]
    %509 = vset.pattern.permute.xlu0 6
    %510 = vperm.xlu0 %509, %v459
    %v511 = vpop.permute.xlu0 %510
    %v513 = vmul.f32 %v511, %v508
    %v514 = vadd.f32 %v506, %v513
    %s515 = scalar_lea.vmem [#allocation6], 56
    %v516 = vld [vmem:[%s515] sm:$0xff]
    %517 = vset.pattern.permute.xlu0 7
    %518 = vperm.xlu0 %517, %v459
    %v519 = vpop.permute.xlu0 %518
    %v521 = vmul.f32 %v519, %v516
    %v522 = vadd.f32 %v514, %v521
    %s523 = scalar_lea.vmem [#allocation6], 64
    %v524 = vld [vmem:[%s523] sm:$0xff]
    %525 = vset.pattern.permute.xlu0 8
    %526 = vperm.xlu0 %525, %v459
    %v527 = vpop.permute.xlu0 %526
    %v529 = vmul.f32 %v527, %v524
    %v530 = vadd.f32 %v522, %v529
    %s531 = scalar_lea.vmem [#allocation6], 72
    %v532 = vld [vmem:[%s531] sm:$0xff]
    %533 = vset.pattern.permute.xlu0 9
    %534 = vperm.xlu0 %533, %v459
    %v535 = vpop.permute.xlu0 %534
    %v537 = vmul.f32 %v535, %v532
    %v538 = vadd.f32 %v530, %v537
    %v539 = vld [vmem:[#allocation11] sm:$0xff]
    %v540 = vld [vmem:[#allocation11 + $0x8] sm:$0xff]
    %v541 = vld [vmem:[#allocation11 + $0x10] sm:$0xff]
    %v542 = vld [vmem:[#allocation11 + $0x18] sm:$0xff]
    %v543 = vld [vmem:[#allocation11 + $0x20] sm:$0xff]
    %v544 = vld [vmem:[#allocation11 + $0x28] sm:$0xff]
    %v545 = vld [vmem:[#allocation11 + $0x30] sm:$0xff]
    %v546 = vld [vmem:[#allocation11 + $0x38] sm:$0xff]
    %v547 = vld [vmem:[#allocation11 + $0x40] sm:$0xff]
    %v548 = vld [vmem:[#allocation11 + $0x48] sm:$0xff]
    %v549 = vld [vmem:[#allocation11 + $0x50] sm:$0xff]
    %v550 = vld [vmem:[#allocation11 + $0x58] sm:$0xff]
    %v551 = vld [vmem:[#allocation11 + $0x60] sm:$0xff]
    %v552 = vld [vmem:[#allocation11 + $0x68] sm:$0xff]
    %v553 = vld [vmem:[#allocation11 + $0x70] sm:$0xff]
    %v554 = vld [vmem:[#allocation11 + $0x78] sm:$0xff]
    %555 = vmatprep.subr.mxu0 0.0
    %556 = vmatpush1.msra.mxu0 %v539
    %557 = vmatprep.subr.mxu0 0.0
    %558 = vmatpush1.msra.mxu0 %v540
    %559 = vmatprep.subr.mxu0 0.0
    %560 = vmatpush1.msra.mxu0 %v541
    %561 = vmatprep.subr.mxu0 0.0
    %562 = vmatpush1.msra.mxu0 %v542
    %563 = vmatprep.subr.mxu0 0.0
    %564 = vmatpush1.msra.mxu0 %v543
    %565 = vmatprep.subr.mxu0 0.0
    %566 = vmatpush1.msra.mxu0 %v544
    %567 = vmatprep.subr.mxu0 0.0
    %568 = vmatpush1.msra.mxu0 %v545
    %569 = vmatprep.subr.mxu0 0.0
    %570 = vmatpush1.msra.mxu0 %v546
    %571 = vmatprep.subr.mxu0 0.0
    %572 = vmatpush1.msra.mxu0 %v547
    %573 = vmatprep.subr.mxu0 0.0
    %574 = vmatpush1.msra.mxu0 %v548
    %575 = vmatprep.subr.mxu0 0.0
    %576 = vmatpush1.msra.mxu0 %v549
    %577 = vmatprep.subr.mxu0 0.0
    %578 = vmatpush1.msra.mxu0 %v550
    %579 = vmatprep.subr.mxu0 0.0
    %580 = vmatpush1.msra.mxu0 %v551
    %581 = vmatprep.subr.mxu0 0.0
    %582 = vmatpush1.msra.mxu0 %v552
    %583 = vmatprep.subr.mxu0 0.0
    %584 = vmatpush1.msra.mxu0 %v553
    %585 = vmatprep.subr.mxu0 0.0
    %586 = vmatpush1.msra.mxu0 %v554
    %587 = vmatprep.subr.mxu0 0.0
    %588 = vmatpush1.msra.mxu0 0.0
    %589 = vmatprep.subr.mxu0 0.0
    %590 = vmatpush1.msra.mxu0 0.0
    %591 = vmatprep.subr.mxu0 0.0
    %592 = vmatpush1.msra.mxu0 0.0
    %593 = vmatprep.subr.mxu0 0.0
    %594 = vmatpush1.msra.mxu0 0.0
    %595 = vmatprep.subr.mxu0 0.0
    %596 = vmatpush1.msra.mxu0 0.0
    %597 = vmatprep.subr.mxu0 0.0
    %598 = vmatpush1.msra.mxu0 0.0
    %599 = vmatprep.subr.mxu0 0.0
    %600 = vmatpush1.msra.mxu0 0.0
    %601 = vmatprep.subr.mxu0 0.0
    %602 = vmatpush1.msra.mxu0 0.0
    %603 = vmatprep.subr.mxu0 0.0
    %604 = vmatpush1.msra.mxu0 0.0
    %605 = vmatprep.subr.mxu0 0.0
    %606 = vmatpush1.msra.mxu0 0.0
    %607 = vmatprep.subr.mxu0 0.0
    %608 = vmatpush1.msra.mxu0 0.0
    %609 = vmatprep.subr.mxu0 0.0
    %610 = vmatpush1.msra.mxu0 0.0
    %611 = vmatprep.subr.mxu0 0.0
    %612 = vmatpush1.msra.mxu0 0.0
    %613 = vmatprep.subr.mxu0 0.0
    %614 = vmatpush1.msra.mxu0 0.0
    %615 = vmatprep.subr.mxu0 0.0
    %616 = vmatpush1.msra.mxu0 0.0
    %617 = vmatprep.subr.mxu0 0.0
    %618 = vmatpush1.msra.mxu0 0.0
    %619 = vmatprep.mubr.f32.mxu0 0.0
    %620 = vmatmul.mubr.f32.gmra.mrb[0].mxu0 %v538
    %v621 = vpop.f32.mrb[0].mxu0
    %v622 = vadd.f32 0.0, %v621
    %v623 = vpop.f32.mrb[0].mxu0
    %624 = vdwg.mxu0
    %v625 = vadd.f32 %v363, %v622
    %v626 = vmax.f32 %v625, 0.0
    %v627 = vld [vmem:[#allocation12] sm:$0xff]
    %v628 = vld [vmem:[#allocation12 + $0x8] sm:$0xff]
    %v629 = vld [vmem:[#allocation12 + $0x10] sm:$0xff]
    %v630 = vld [vmem:[#allocation12 + $0x18] sm:$0xff]
    %v631 = vld [vmem:[#allocation12 + $0x20] sm:$0xff]
    %v632 = vld [vmem:[#allocation12 + $0x28] sm:$0xff]
    %v633 = vld [vmem:[#allocation12 + $0x30] sm:$0xff]
    %v634 = vld [vmem:[#allocation12 + $0x38] sm:$0xff]
    %v635 = vld [vmem:[#allocation12 + $0x40] sm:$0xff]
    %v636 = vld [vmem:[#allocation12 + $0x48] sm:$0xff]
    %v637 = vld [vmem:[#allocation12 + $0x50] sm:$0xff]
    %v638 = vld [vmem:[#allocation12 + $0x58] sm:$0xff]
    %v639 = vld [vmem:[#allocation12 + $0x60] sm:$0xff]
    %v640 = vld [vmem:[#allocation12 + $0x68] sm:$0xff]
    %v641 = vld [vmem:[#allocation12 + $0x70] sm:$0xff]
    %v642 = vld [vmem:[#allocation12 + $0x78] sm:$0xff]
    %v643 = vld [vmem:[#allocation12 + $0x80] sm:$0xff]
    %v644 = vld [vmem:[#allocation12 + $0x88] sm:$0xff]
    %v645 = vld [vmem:[#allocation12 + $0x90] sm:$0xff]
    %v646 = vld [vmem:[#allocation12 + $0x98] sm:$0xff]
    %v647 = vld [vmem:[#allocation12 + $0xa0] sm:$0xff]
    %v648 = vld [vmem:[#allocation12 + $0xa8] sm:$0xff]
    %v649 = vld [vmem:[#allocation12 + $0xb0] sm:$0xff]
    %v650 = vld [vmem:[#allocation12 + $0xb8] sm:$0xff]
    %v651 = vld [vmem:[#allocation12 + $0xc0] sm:$0xff]
    %v652 = vld [vmem:[#allocation12 + $0xc8] sm:$0xff]
    %v653 = vld [vmem:[#allocation12 + $0xd0] sm:$0xff]
    %v654 = vld [vmem:[#allocation12 + $0xd8] sm:$0xff]
    %v655 = vld [vmem:[#allocation12 + $0xe0] sm:$0xff]
    %v656 = vld [vmem:[#allocation12 + $0xe8] sm:$0xff]
    %v657 = vld [vmem:[#allocation12 + $0xf0] sm:$0xff]
    %v658 = vld [vmem:[#allocation12 + $0xf8] sm:$0xff]
    %v659 = vld [vmem:[#allocation12 + $0x100] sm:$0xff]
    %v660 = vld [vmem:[#allocation12 + $0x108] sm:$0xff]
    %v661 = vld [vmem:[#allocation12 + $0x110] sm:$0xff]
    %v662 = vld [vmem:[#allocation12 + $0x118] sm:$0xff]
    %v663 = vld [vmem:[#allocation12 + $0x120] sm:$0xff]
    %v664 = vld [vmem:[#allocation12 + $0x128] sm:$0xff]
    %v665 = vld [vmem:[#allocation12 + $0x130] sm:$0xff]
    %v666 = vld [vmem:[#allocation12 + $0x138] sm:$0xff]
    %v667 = vld [vmem:[#allocation12 + $0x140] sm:$0xff]
    %v668 = vld [vmem:[#allocation12 + $0x148] sm:$0xff]
    %v669 = vld [vmem:[#allocation12 + $0x150] sm:$0xff]
    %v670 = vld [vmem:[#allocation12 + $0x158] sm:$0xff]
    %v671 = vld [vmem:[#allocation12 + $0x160] sm:$0xff]
    %v672 = vld [vmem:[#allocation12 + $0x168] sm:$0xff]
    %v673 = vld [vmem:[#allocation12 + $0x170] sm:$0xff]
    %v674 = vld [vmem:[#allocation12 + $0x178] sm:$0xff]
    %v675 = vld [vmem:[#allocation12 + $0x180] sm:$0xff]
    %v676 = vld [vmem:[#allocation12 + $0x188] sm:$0xff]
    %v677 = vld [vmem:[#allocation12 + $0x190] sm:$0xff]
    %v678 = vld [vmem:[#allocation12 + $0x198] sm:$0xff]
    %v679 = vld [vmem:[#allocation12 + $0x1a0] sm:$0xff]
    %v680 = vld [vmem:[#allocation12 + $0x1a8] sm:$0xff]
    %v681 = vld [vmem:[#allocation12 + $0x1b0] sm:$0xff]
    %v682 = vld [vmem:[#allocation12 + $0x1b8] sm:$0xff]
    %v683 = vld [vmem:[#allocation12 + $0x1c0] sm:$0xff]
    %v684 = vld [vmem:[#allocation12 + $0x1c8] sm:$0xff]
    %v685 = vld [vmem:[#allocation12 + $0x1d0] sm:$0xff]
    %v686 = vld [vmem:[#allocation12 + $0x1d8] sm:$0xff]
    %v687 = vld [vmem:[#allocation12 + $0x1e0] sm:$0xff]
    %v688 = vld [vmem:[#allocation12 + $0x1e8] sm:$0xff]
    %v689 = vld [vmem:[#allocation12 + $0x1f0] sm:$0xff]
    %v690 = vld [vmem:[#allocation12 + $0x1f8] sm:$0xff]
    %v691 = vld [vmem:[#allocation14] sm:$0xff]
    %v692 = vld [vmem:[#allocation14 + $0x8] sm:$0xff]
    %v693 = vld [vmem:[#allocation14 + $0x10] sm:$0xff]
    %v694 = vld [vmem:[#allocation14 + $0x18] sm:$0xff]
    %v695 = vld [vmem:[#allocation14 + $0x20] sm:$0xff]
    %v696 = vld [vmem:[#allocation14 + $0x28] sm:$0xff]
    %v697 = vld [vmem:[#allocation14 + $0x30] sm:$0xff]
    %v698 = vld [vmem:[#allocation14 + $0x38] sm:$0xff]
    %v699 = vld [vmem:[#allocation14 + $0x40] sm:$0xff]
    %v700 = vld [vmem:[#allocation14 + $0x48] sm:$0xff]
    %v701 = vld [vmem:[#allocation14 + $0x50] sm:$0xff]
    %v702 = vld [vmem:[#allocation14 + $0x58] sm:$0xff]
    %v703 = vld [vmem:[#allocation14 + $0x60] sm:$0xff]
    %v704 = vld [vmem:[#allocation14 + $0x68] sm:$0xff]
    %v705 = vld [vmem:[#allocation14 + $0x70] sm:$0xff]
    %v706 = vld [vmem:[#allocation14 + $0x78] sm:$0xff]
    %v707 = vld [vmem:[#allocation14 + $0x80] sm:$0xff]
    %v708 = vld [vmem:[#allocation14 + $0x88] sm:$0xff]
    %v709 = vld [vmem:[#allocation14 + $0x90] sm:$0xff]
    %v710 = vld [vmem:[#allocation14 + $0x98] sm:$0xff]
    %v711 = vld [vmem:[#allocation14 + $0xa0] sm:$0xff]
    %v712 = vld [vmem:[#allocation14 + $0xa8] sm:$0xff]
    %v713 = vld [vmem:[#allocation14 + $0xb0] sm:$0xff]
    %v714 = vld [vmem:[#allocation14 + $0xb8] sm:$0xff]
    %v715 = vld [vmem:[#allocation14 + $0xc0] sm:$0xff]
    %v716 = vld [vmem:[#allocation14 + $0xc8] sm:$0xff]
    %v717 = vld [vmem:[#allocation14 + $0xd0] sm:$0xff]
    %v718 = vld [vmem:[#allocation14 + $0xd8] sm:$0xff]
    %v719 = vld [vmem:[#allocation14 + $0xe0] sm:$0xff]
    %v720 = vld [vmem:[#allocation14 + $0xe8] sm:$0xff]
    %v721 = vld [vmem:[#allocation14 + $0xf0] sm:$0xff]
    %v722 = vld [vmem:[#allocation14 + $0xf8] sm:$0xff]
    %v723 = vld [vmem:[#allocation14 + $0x100] sm:$0xff]
    %v724 = vld [vmem:[#allocation14 + $0x108] sm:$0xff]
    %v725 = vld [vmem:[#allocation14 + $0x110] sm:$0xff]
    %v726 = vld [vmem:[#allocation14 + $0x118] sm:$0xff]
    %v727 = vld [vmem:[#allocation14 + $0x120] sm:$0xff]
    %v728 = vld [vmem:[#allocation14 + $0x128] sm:$0xff]
    %v729 = vld [vmem:[#allocation14 + $0x130] sm:$0xff]
    %v730 = vld [vmem:[#allocation14 + $0x138] sm:$0xff]
    %v731 = vld [vmem:[#allocation14 + $0x140] sm:$0xff]
    %v732 = vld [vmem:[#allocation14 + $0x148] sm:$0xff]
    %v733 = vld [vmem:[#allocation14 + $0x150] sm:$0xff]
    %v734 = vld [vmem:[#allocation14 + $0x158] sm:$0xff]
    %v735 = vld [vmem:[#allocation14 + $0x160] sm:$0xff]
    %v736 = vld [vmem:[#allocation14 + $0x168] sm:$0xff]
    %v737 = vld [vmem:[#allocation14 + $0x170] sm:$0xff]
    %v738 = vld [vmem:[#allocation14 + $0x178] sm:$0xff]
    %v739 = vld [vmem:[#allocation14 + $0x180] sm:$0xff]
    %v740 = vld [vmem:[#allocation14 + $0x188] sm:$0xff]
    %v741 = vld [vmem:[#allocation14 + $0x190] sm:$0xff]
    %v742 = vld [vmem:[#allocation14 + $0x198] sm:$0xff]
    %v743 = vld [vmem:[#allocation14 + $0x1a0] sm:$0xff]
    %v744 = vld [vmem:[#allocation14 + $0x1a8] sm:$0xff]
    %v745 = vld [vmem:[#allocation14 + $0x1b0] sm:$0xff]
    %v746 = vld [vmem:[#allocation14 + $0x1b8] sm:$0xff]
    %v747 = vld [vmem:[#allocation14 + $0x1c0] sm:$0xff]
    %v748 = vld [vmem:[#allocation14 + $0x1c8] sm:$0xff]
    %v749 = vld [vmem:[#allocation14 + $0x1d0] sm:$0xff]
    %v750 = vld [vmem:[#allocation14 + $0x1d8] sm:$0xff]
    %v751 = vld [vmem:[#allocation14 + $0x1e0] sm:$0xff]
    %v752 = vld [vmem:[#allocation14 + $0x1e8] sm:$0xff]
    %v753 = vld [vmem:[#allocation14 + $0x1f0] sm:$0xff]
    %v754 = vld [vmem:[#allocation14 + $0x1f8] sm:$0xff]
    %755 = vmatprep.subr.mxu0 %v692
    %756 = vmatpush1.msra.mxu0 %v691
    %757 = vmatprep.subr.mxu0 %v696
    %758 = vmatpush1.msra.mxu0 %v695
    %759 = vmatprep.subr.mxu0 %v700
    %760 = vmatpush1.msra.mxu0 %v699
    %761 = vmatprep.subr.mxu0 %v704
    %762 = vmatpush1.msra.mxu0 %v703
    %763 = vmatprep.subr.mxu0 %v708
    %764 = vmatpush1.msra.mxu0 %v707
    %765 = vmatprep.subr.mxu0 %v712
    %766 = vmatpush1.msra.mxu0 %v711
    %767 = vmatprep.subr.mxu0 %v716
    %768 = vmatpush1.msra.mxu0 %v715
    %769 = vmatprep.subr.mxu0 %v720
    %770 = vmatpush1.msra.mxu0 %v719
    %771 = vmatprep.subr.mxu0 %v724
    %772 = vmatpush1.msra.mxu0 %v723
    %773 = vmatprep.subr.mxu0 %v728
    %774 = vmatpush1.msra.mxu0 %v727
    %775 = vmatprep.subr.mxu0 %v732
    %776 = vmatpush1.msra.mxu0 %v731
    %777 = vmatprep.subr.mxu0 %v736
    %778 = vmatpush1.msra.mxu0 %v735
    %779 = vmatprep.subr.mxu0 %v740
    %780 = vmatpush1.msra.mxu0 %v739
    %781 = vmatprep.subr.mxu0 %v744
    %782 = vmatpush1.msra.mxu0 %v743
    %783 = vmatprep.subr.mxu0 %v748
    %784 = vmatpush1.msra.mxu0 %v747
    %785 = vmatprep.subr.mxu0 %v752
    %786 = vmatpush1.msra.mxu0 %v751
    %787 = vmatprep.subr.mxu0 0.0
    %788 = vmatpush1.msra.mxu0 0.0
    %789 = vmatprep.subr.mxu0 0.0
    %790 = vmatpush1.msra.mxu0 0.0
    %791 = vmatprep.subr.mxu0 0.0
    %792 = vmatpush1.msra.mxu0 0.0
    %793 = vmatprep.subr.mxu0 0.0
    %794 = vmatpush1.msra.mxu0 0.0
    %795 = vmatprep.subr.mxu0 0.0
    %796 = vmatpush1.msra.mxu0 0.0
    %797 = vmatprep.subr.mxu0 0.0
    %798 = vmatpush1.msra.mxu0 0.0
    %799 = vmatprep.subr.mxu0 0.0
    %800 = vmatpush1.msra.mxu0 0.0
    %801 = vmatprep.subr.mxu0 0.0
    %802 = vmatpush1.msra.mxu0 0.0
    %803 = vmatprep.subr.mxu0 0.0
    %804 = vmatpush1.msra.mxu0 0.0
    %805 = vmatprep.subr.mxu0 0.0
    %806 = vmatpush1.msra.mxu0 0.0
    %807 = vmatprep.subr.mxu0 0.0
    %808 = vmatpush1.msra.mxu0 0.0
    %809 = vmatprep.subr.mxu0 0.0
    %810 = vmatpush1.msra.mxu0 0.0
    %811 = vmatprep.subr.mxu0 0.0
    %812 = vmatpush1.msra.mxu0 0.0
    %813 = vmatprep.subr.mxu0 0.0
    %814 = vmatpush1.msra.mxu0 0.0
    %815 = vmatprep.subr.mxu0 0.0
    %816 = vmatpush1.msra.mxu0 0.0
    %817 = vmatprep.subr.mxu0 0.0
    %818 = vmatpush1.msra.mxu0 0.0
    %819 = vmatprep.mubr.f32.mxu0 0.0
    %820 = vmatmul.mubr.f32.gmra.mrb[0].mxu0 %v361
    %v821 = vpop.f32.mrb[0].mxu0
    %v822 = vadd.f32 0.0, %v821
    %v823 = vpop.f32.mrb[0].mxu0
    %v824 = vadd.f32 0.0, %v823
    %825 = vdwg.mxu0
    %826 = vmatprep.subr.mxu0 %v694
    %827 = vmatpush1.msra.mxu0 %v693
    %828 = vmatprep.subr.mxu0 %v698
    %829 = vmatpush1.msra.mxu0 %v697
    %830 = vmatprep.subr.mxu0 %v702
    %831 = vmatpush1.msra.mxu0 %v701
    %832 = vmatprep.subr.mxu0 %v706
    %833 = vmatpush1.msra.mxu0 %v705
    %834 = vmatprep.subr.mxu0 %v710
    %835 = vmatpush1.msra.mxu0 %v709
    %836 = vmatprep.subr.mxu0 %v714
    %837 = vmatpush1.msra.mxu0 %v713
    %838 = vmatprep.subr.mxu0 %v718
    %839 = vmatpush1.msra.mxu0 %v717
    %840 = vmatprep.subr.mxu0 %v722
    %841 = vmatpush1.msra.mxu0 %v721
    %842 = vmatprep.subr.mxu0 %v726
    %843 = vmatpush1.msra.mxu0 %v725
    %844 = vmatprep.subr.mxu0 %v730
    %845 = vmatpush1.msra.mxu0 %v729
    %846 = vmatprep.subr.mxu0 %v734
    %847 = vmatpush1.msra.mxu0 %v733
    %848 = vmatprep.subr.mxu0 %v738
    %849 = vmatpush1.msra.mxu0 %v737
    %850 = vmatprep.subr.mxu0 %v742
    %851 = vmatpush1.msra.mxu0 %v741
    %852 = vmatprep.subr.mxu0 %v746
    %853 = vmatpush1.msra.mxu0 %v745
    %854 = vmatprep.subr.mxu0 %v750
    %855 = vmatpush1.msra.mxu0 %v749
    %856 = vmatprep.subr.mxu0 %v754
    %857 = vmatpush1.msra.mxu0 %v753
    %858 = vmatprep.subr.mxu0 0.0
    %859 = vmatpush1.msra.mxu0 0.0
    %860 = vmatprep.subr.mxu0 0.0
    %861 = vmatpush1.msra.mxu0 0.0
    %862 = vmatprep.subr.mxu0 0.0
    %863 = vmatpush1.msra.mxu0 0.0
    %864 = vmatprep.subr.mxu0 0.0
    %865 = vmatpush1.msra.mxu0 0.0
    %866 = vmatprep.subr.mxu0 0.0
    %867 = vmatpush1.msra.mxu0 0.0
    %868 = vmatprep.subr.mxu0 0.0
    %869 = vmatpush1.msra.mxu0 0.0
    %870 = vmatprep.subr.mxu0 0.0
    %871 = vmatpush1.msra.mxu0 0.0
    %872 = vmatprep.subr.mxu0 0.0
    %873 = vmatpush1.msra.mxu0 0.0
    %874 = vmatprep.subr.mxu0 0.0
    %875 = vmatpush1.msra.mxu0 0.0
    %876 = vmatprep.subr.mxu0 0.0
    %877 = vmatpush1.msra.mxu0 0.0
    %878 = vmatprep.subr.mxu0 0.0
    %879 = vmatpush1.msra.mxu0 0.0
    %880 = vmatprep.subr.mxu0 0.0
    %881 = vmatpush1.msra.mxu0 0.0
    %882 = vmatprep.subr.mxu0 0.0
    %883 = vmatpush1.msra.mxu0 0.0
    %884 = vmatprep.subr.mxu0 0.0
    %885 = vmatpush1.msra.mxu0 0.0
    %886 = vmatprep.subr.mxu0 0.0
    %887 = vmatpush1.msra.mxu0 0.0
    %888 = vmatprep.subr.mxu0 0.0
    %889 = vmatpush1.msra.mxu0 0.0
    %890 = vmatprep.mubr.f32.mxu0 0.0
    %891 = vmatmul.mubr.f32.gmra.mrb[0].mxu0 %v361
    %v892 = vpop.f32.mrb[0].mxu0
    %v893 = vadd.f32 0.0, %v892
    %v894 = vpop.f32.mrb[0].mxu0
    %v895 = vadd.f32 0.0, %v894
    %896 = vdwg.mxu0
    %897 = vmatprep.subr.mxu0 %v628
    %898 = vmatpush1.msra.mxu0 %v627
    %899 = vmatprep.subr.mxu0 %v632
    %900 = vmatpush1.msra.mxu0 %v631
    %901 = vmatprep.subr.mxu0 %v636
    %902 = vmatpush1.msra.mxu0 %v635
    %903 = vmatprep.subr.mxu0 %v640
    %904 = vmatpush1.msra.mxu0 %v639
    %905 = vmatprep.subr.mxu0 %v644
    %906 = vmatpush1.msra.mxu0 %v643
    %907 = vmatprep.subr.mxu0 %v648
    %908 = vmatpush1.msra.mxu0 %v647
    %909 = vmatprep.subr.mxu0 %v652
    %910 = vmatpush1.msra.mxu0 %v651
    %911 = vmatprep.subr.mxu0 %v656
    %912 = vmatpush1.msra.mxu0 %v655
    %913 = vmatprep.subr.mxu0 %v660
    %914 = vmatpush1.msra.mxu0 %v659
    %915 = vmatprep.subr.mxu0 %v664
    %916 = vmatpush1.msra.mxu0 %v663
    %917 = vmatprep.subr.mxu0 %v668
    %918 = vmatpush1.msra.mxu0 %v667
    %919 = vmatprep.subr.mxu0 %v672
    %920 = vmatpush1.msra.mxu0 %v671
    %921 = vmatprep.subr.mxu0 %v676
    %922 = vmatpush1.msra.mxu0 %v675
    %923 = vmatprep.subr.mxu0 %v680
    %924 = vmatpush1.msra.mxu0 %v679
    %925 = vmatprep.subr.mxu0 %v684
    %926 = vmatpush1.msra.mxu0 %v683
    %927 = vmatprep.subr.mxu0 %v688
    %928 = vmatpush1.msra.mxu0 %v687
    %929 = vmatprep.subr.mxu0 0.0
    %930 = vmatpush1.msra.mxu0 0.0
    %931 = vmatprep.subr.mxu0 0.0
    %932 = vmatpush1.msra.mxu0 0.0
    %933 = vmatprep.subr.mxu0 0.0
    %934 = vmatpush1.msra.mxu0 0.0
    %935 = vmatprep.subr.mxu0 0.0
    %936 = vmatpush1.msra.mxu0 0.0
    %937 = vmatprep.subr.mxu0 0.0
    %938 = vmatpush1.msra.mxu0 0.0
    %939 = vmatprep.subr.mxu0 0.0
    %940 = vmatpush1.msra.mxu0 0.0
    %941 = vmatprep.subr.mxu0 0.0
    %942 = vmatpush1.msra.mxu0 0.0
    %943 = vmatprep.subr.mxu0 0.0
    %944 = vmatpush1.msra.mxu0 0.0
    %945 = vmatprep.subr.mxu0 0.0
    %946 = vmatpush1.msra.mxu0 0.0
    %947 = vmatprep.subr.mxu0 0.0
    %948 = vmatpush1.msra.mxu0 0.0
    %949 = vmatprep.subr.mxu0 0.0
    %950 = vmatpush1.msra.mxu0 0.0
    %951 = vmatprep.subr.mxu0 0.0
    %952 = vmatpush1.msra.mxu0 0.0
    %953 = vmatprep.subr.mxu0 0.0
    %954 = vmatpush1.msra.mxu0 0.0
    %955 = vmatprep.subr.mxu0 0.0
    %956 = vmatpush1.msra.mxu0 0.0
    %957 = vmatprep.subr.mxu0 0.0
    %958 = vmatpush1.msra.mxu0 0.0
    %959 = vmatprep.subr.mxu0 0.0
    %960 = vmatpush1.msra.mxu0 0.0
    %961 = vmatprep.mubr.f32.mxu0 0.0
    %962 = vmatmul.mubr.f32.gmra.mrb[0].mxu0 %v626
    %v963 = vpop.f32.mrb[0].mxu0
    %v964 = vadd.f32 %v822, %v963
    %v965 = vpop.f32.mrb[0].mxu0
    %v966 = vadd.f32 %v824, %v965
    %967 = vdwg.mxu0
    %968 = vmatprep.subr.mxu0 %v630
    %969 = vmatpush1.msra.mxu0 %v629
    %970 = vmatprep.subr.mxu0 %v634
    %971 = vmatpush1.msra.mxu0 %v633
    %972 = vmatprep.subr.mxu0 %v638
    %973 = vmatpush1.msra.mxu0 %v637
    %974 = vmatprep.subr.mxu0 %v642
    %975 = vmatpush1.msra.mxu0 %v641
    %976 = vmatprep.subr.mxu0 %v646
    %977 = vmatpush1.msra.mxu0 %v645
    %978 = vmatprep.subr.mxu0 %v650
    %979 = vmatpush1.msra.mxu0 %v649
    %980 = vmatprep.subr.mxu0 %v654
    %981 = vmatpush1.msra.mxu0 %v653
    %982 = vmatprep.subr.mxu0 %v658
    %983 = vmatpush1.msra.mxu0 %v657
    %984 = vmatprep.subr.mxu0 %v662
    %985 = vmatpush1.msra.mxu0 %v661
    %986 = vmatprep.subr.mxu0 %v666
    %987 = vmatpush1.msra.mxu0 %v665
    %988 = vmatprep.subr.mxu0 %v670
    %989 = vmatpush1.msra.mxu0 %v669
    %990 = vmatprep.subr.mxu0 %v674
    %991 = vmatpush1.msra.mxu0 %v673
    %992 = vmatprep.subr.mxu0 %v678
    %993 = vmatpush1.msra.mxu0 %v677
    %994 = vmatprep.subr.mxu0 %v682
    %995 = vmatpush1.msra.mxu0 %v681
    %996 = vmatprep.subr.mxu0 %v686
    %997 = vmatpush1.msra.mxu0 %v685
    %998 = vmatprep.subr.mxu0 %v690
    %999 = vmatpush1.msra.mxu0 %v689
    %1000 = vmatprep.subr.mxu0 0.0
    %1001 = vmatpush1.msra.mxu0 0.0
    %1002 = vmatprep.subr.mxu0 0.0
    %1003 = vmatpush1.msra.mxu0 0.0
    %1004 = vmatprep.subr.mxu0 0.0
    %1005 = vmatpush1.msra.mxu0 0.0
    %1006 = vmatprep.subr.mxu0 0.0
    %1007 = vmatpush1.msra.mxu0 0.0
    %1008 = vmatprep.subr.mxu0 0.0
    %1009 = vmatpush1.msra.mxu0 0.0
    %1010 = vmatprep.subr.mxu0 0.0
    %1011 = vmatpush1.msra.mxu0 0.0
    %1012 = vmatprep.subr.mxu0 0.0
    %1013 = vmatpush1.msra.mxu0 0.0
    %1014 = vmatprep.subr.mxu0 0.0
    %1015 = vmatpush1.msra.mxu0 0.0
    %1016 = vmatprep.subr.mxu0 0.0
    %1017 = vmatpush1.msra.mxu0 0.0
    %1018 = vmatprep.subr.mxu0 0.0
    %1019 = vmatpush1.msra.mxu0 0.0
    %1020 = vmatprep.subr.mxu0 0.0
    %1021 = vmatpush1.msra.mxu0 0.0
    %1022 = vmatprep.subr.mxu0 0.0
    %1023 = vmatpush1.msra.mxu0 0.0
    %1024 = vmatprep.subr.mxu0 0.0
    %1025 = vmatpush1.msra.mxu0 0.0
    %1026 = vmatprep.subr.mxu0 0.0
    %1027 = vmatpush1.msra.mxu0 0.0
    %1028 = vmatprep.subr.mxu0 0.0
    %1029 = vmatpush1.msra.mxu0 0.0
    %1030 = vmatprep.subr.mxu0 0.0
    %1031 = vmatpush1.msra.mxu0 0.0
    %1032 = vmatprep.mubr.f32.mxu0 0.0
    %1033 = vmatmul.mubr.f32.gmra.mrb[0].mxu0 %v626
    %v1034 = vpop.f32.mrb[0].mxu0
    %v1035 = vadd.f32 %v893, %v1034
    %v1036 = vpop.f32.mrb[0].mxu0
    %v1037 = vadd.f32 %v895, %v1036
    %1038 = vdwg.mxu0
    %v1040 = vlaneseq
    %v1041 = vshrl.u32 %v1040, 7
    %v1042 = vsub.s32 0, %v1041
    %v1043 = vrot.slane %v148, %v1042
    %v1044 = vlaneseq
    %v1045 = vshrl.u32 %v1044, 7
    %v1046 = vsub.s32 1, %v1045
    %v1047 = vrot.slane %v148, %v1046
    %v1048 = vlaneseq
    %v1049 = vshrl.u32 %v1048, 7
    %v1050 = vsub.s32 2, %v1049
    %v1051 = vrot.slane %v148, %v1050
    %v1052 = vlaneseq
    %v1053 = vshrl.u32 %v1052, 7
    %v1054 = vsub.s32 3, %v1053
    %v1055 = vrot.slane %v148, %v1054
    %v1060 = vadd.f32 %v964, %v1043
    %v1061 = vadd.f32 %v966, %v1047
    %v1062 = vadd.f32 %v1035, %v1051
    %v1063 = vadd.f32 %v1037, %v1055
    %v1064 = vxor.u32 %v1060, 2147483648
    %v1065 = vmul.f32 %v1064, 1.442695
    %v1066 = vpow.pop %v1065
    %v1067 = vadd.f32 %v1066, 1.0
    %v1068 = vrcp.pop %v1067
    %v1069 = vmul.f32 1.0, %v1068
    %v1070 = vxor.u32 %v1061, 2147483648
    %v1071 = vmul.f32 %v1070, 1.442695
    %v1072 = vpow.pop %v1071
    %v1073 = vadd.f32 %v1072, 1.0
    %v1074 = vrcp.pop %v1073
    %v1075 = vmul.f32 1.0, %v1074
    %v1076 = vmul.f32 %v1069, %v1063
    %v1077 = vadd.f32 %v1062, %v1076
    %v1078 = vtanh.pop %v1077
    %v1079 = vsub.f32 1.0, %v1075
    %v1080 = vmul.f32 %v1079, %v1078
    %v1081 = vmul.f32 %v1075, %v361
    %v1082 = vadd.f32 %v1080, %v1081
    %v1083 = vld [vmem:[#allocation15] sm:$0xff]
    %v1084 = vld [vmem:[#allocation15 + $0x8] sm:$0xff]
    %v1085 = vld [vmem:[#allocation15 + $0x10] sm:$0xff]
    %v1086 = vld [vmem:[#allocation15 + $0x18] sm:$0xff]
    %v1087 = vld [vmem:[#allocation15 + $0x20] sm:$0xff]
    %v1088 = vld [vmem:[#allocation15 + $0x28] sm:$0xff]
    %v1089 = vld [vmem:[#allocation15 + $0x30] sm:$0xff]
    %v1090 = vld [vmem:[#allocation15 + $0x38] sm:$0xff]
    %v1091 = vld [vmem:[#allocation15 + $0x40] sm:$0xff]
    %v1092 = vld [vmem:[#allocation15 + $0x48] sm:$0xff]
    %v1093 = vld [vmem:[#allocation15 + $0x50] sm:$0xff]
    %v1094 = vld [vmem:[#allocation15 + $0x58] sm:$0xff]
    %v1095 = vld [vmem:[#allocation15 + $0x60] sm:$0xff]
    %v1096 = vld [vmem:[#allocation15 + $0x68] sm:$0xff]
    %v1097 = vld [vmem:[#allocation15 + $0x70] sm:$0xff]
    %v1098 = vld [vmem:[#allocation15 + $0x78] sm:$0xff]
    %v1100 = vlaneseq
    %v1101 = vshrl.u32 %v1100, 7
    %v1102 = vsub.s32 0, %v1101
    %v1103 = vrot.slane %v149, %v1102
    %1105 = vmatprep.subr.mxu0 0.0
    %1106 = vmatpush1.msra.mxu0 %v1083
    %1107 = vmatprep.subr.mxu0 0.0
    %1108 = vmatpush1.msra.mxu0 %v1084
    %1109 = vmatprep.subr.mxu0 0.0
    %1110 = vmatpush1.msra.mxu0 %v1085
    %1111 = vmatprep.subr.mxu0 0.0
    %1112 = vmatpush1.msra.mxu0 %v1086
    %1113 = vmatprep.subr.mxu0 0.0
    %1114 = vmatpush1.msra.mxu0 %v1087
    %1115 = vmatprep.subr.mxu0 0.0
    %1116 = vmatpush1.msra.mxu0 %v1088
    %1117 = vmatprep.subr.mxu0 0.0
    %1118 = vmatpush1.msra.mxu0 %v1089
    %1119 = vmatprep.subr.mxu0 0.0
    %1120 = vmatpush1.msra.mxu0 %v1090
    %1121 = vmatprep.subr.mxu0 0.0
    %1122 = vmatpush1.msra.mxu0 %v1091
    %1123 = vmatprep.subr.mxu0 0.0
    %1124 = vmatpush1.msra.mxu0 %v1092
    %1125 = vmatprep.subr.mxu0 0.0
    %1126 = vmatpush1.msra.mxu0 %v1093
    %1127 = vmatprep.subr.mxu0 0.0
    %1128 = vmatpush1.msra.mxu0 %v1094
    %1129 = vmatprep.subr.mxu0 0.0
    %1130 = vmatpush1.msra.mxu0 %v1095
    %1131 = vmatprep.subr.mxu0 0.0
    %1132 = vmatpush1.msra.mxu0 %v1096
    %1133 = vmatprep.subr.mxu0 0.0
    %1134 = vmatpush1.msra.mxu0 %v1097
    %1135 = vmatprep.subr.mxu0 0.0
    %1136 = vmatpush1.msra.mxu0 %v1098
    %1137 = vmatprep.subr.mxu0 0.0
    %1138 = vmatpush1.msra.mxu0 0.0
    %1139 = vmatprep.subr.mxu0 0.0
    %1140 = vmatpush1.msra.mxu0 0.0
    %1141 = vmatprep.subr.mxu0 0.0
    %1142 = vmatpush1.msra.mxu0 0.0
    %1143 = vmatprep.subr.mxu0 0.0
    %1144 = vmatpush1.msra.mxu0 0.0
    %1145 = vmatprep.subr.mxu0 0.0
    %1146 = vmatpush1.msra.mxu0 0.0
    %1147 = vmatprep.subr.mxu0 0.0
    %1148 = vmatpush1.msra.mxu0 0.0
    %1149 = vmatprep.subr.mxu0 0.0
    %1150 = vmatpush1.msra.mxu0 0.0
    %1151 = vmatprep.subr.mxu0 0.0
    %1152 = vmatpush1.msra.mxu0 0.0
    %1153 = vmatprep.subr.mxu0 0.0
    %1154 = vmatpush1.msra.mxu0 0.0
    %1155 = vmatprep.subr.mxu0 0.0
    %1156 = vmatpush1.msra.mxu0 0.0
    %1157 = vmatprep.subr.mxu0 0.0
    %1158 = vmatpush1.msra.mxu0 0.0
    %1159 = vmatprep.subr.mxu0 0.0
    %1160 = vmatpush1.msra.mxu0 0.0
    %1161 = vmatprep.subr.mxu0 0.0
    %1162 = vmatpush1.msra.mxu0 0.0
    %1163 = vmatprep.subr.mxu0 0.0
    %1164 = vmatpush1.msra.mxu0 0.0
    %1165 = vmatprep.subr.mxu0 0.0
    %1166 = vmatpush1.msra.mxu0 0.0
    %1167 = vmatprep.subr.mxu0 0.0
    %1168 = vmatpush1.msra.mxu0 0.0
    %1169 = vmatprep.mubr.f32.mxu0 0.0
    %1170 = vmatmul.mubr.f32.gmra.mrb[0].mxu0 %v1082
    %v1171 = vpop.f32.mrb[0].mxu0
    %v1172 = vadd.f32 %v1103, %v1171
    %v1173 = vpop.f32.mrb[0].mxu0
    %1174 = vdwg.mxu0
    %1175 = vmax.xlane.f32.xlu0 %v1172
    %v1176 = vpop.xlane.xlu0 %1175
    %v1177 = vsub.f32 %v1172, %v1176
    %v1178 = vmul.f32 %v1177, 1.442695
    %v1179 = vpow.pop %v1178
    %1180 = vadd.xlane.f32.xlu0 %v1179
    %v1181 = vpop.xlane.xlu0 %1180
    %v1182 = vrcp.pop %v1181
    %v1183 = vmul.f32 %v1179, %v1182
    %1184 = vst [vmem:[#allocation17] sm:$0xff] %v1183
    %1185 = vst [vmem:[#allocation17 + $0x8] sm:$0xff] %v1082
    %1186 = vst [vmem:[#allocation17 + $0x10] sm:$0xff] %v459
    // Predicated region
    $region78: #{tpu_custom_call.1} parent=1 // pred_check
      _
    $region79: #{tpu_custom_call.1} parent=1 // pred_check_branch
      %1188 = sbr.rel (0) target = $region81
    $region80: #{tpu_custom_call.1} parent=1 // pred_region
      %s1190 = ssub.s32 384, 384
      %1191 = vsyncadd [#allocation5], %s1190
      %s1193 = sshll.u32 [#allocation17], 4
      %s1194 = int_to_ptr.vmem [resolvable:$true] %s1193
      %1196 = dma.vmem_to_hbm [thread:$0]  %s1194, 384, %s11, [#allocation5]
    $region81: #{tpu_custom_call.1} parent=1 // pred_fallthru
      _
    // Predicated region
    $region82: #{tpu_custom_call.1} parent=1 // pred_check
      _
    $region83: #{tpu_custom_call.1} parent=1 // pred_check_branch
      %1198 = sbr.rel (0) target = $region85
    $region84: #{tpu_custom_call.1} parent=1 // pred_region
      %1199 = dma.done [#allocation5], 384
    $region85: #{tpu_custom_call.1} parent=1 // pred_fallthru
      _
    %1200 = vsyncpa [#allocation4], 1
    %1201 = vsyncpa [#allocation7], 1
    %1202 = vsyncpa [#allocation10], 1
    %1203 = vsyncpa [#allocation13], 1
    %1204 = vsyncpa [#allocation16], 1
    %1205 = vsyncpa [#allocation5], 1

</llo_original>
